<compile_context>
chip_gen: v5e
topology: v5e:2x2
jax: 0.10.0
libtpu: 0.0.40
codegen_flags: <defaults>
</compile_context>

<pallas_src>
import math

import jax
import jax.numpy as jnp
from jax import lax
from jax.experimental import pallas as pl
from jax.experimental.pallas import tpu as pltpu

# ----------------------------- small synthetic BERT config -----------------------------
BATCH = 2
SEQ = 8
HIDDEN = 64
N_HEADS = 4
HEAD_DIM = HIDDEN // N_HEADS
INTERMEDIATE = 128
N_LAYERS = 2
VOCAB = 64
MAX_POS = 100          # max_sequence_length=100 from the module
N_TYPES = 2
N_CLASSES = 3
CLS_PAD = 128          # classifier output padded to a lane-dense 128-wide slab
LN_EPS = 1e-12
ATTN_SCALE = 1.0 / math.sqrt(HEAD_DIM)

TOKENS = BATCH * SEQ                 # batch-merged token-slab rows
SCORE_ROWS = BATCH * N_HEADS * SEQ   # stacked per-(batch, head) score rows


# --------------------------------- in-kernel helpers ------------------------------------
def _layernorm(x, g, b):
    mu = jnp.mean(x, axis=-1, keepdims=True)
    xc = x - mu
    var = jnp.mean(xc * xc, axis=-1, keepdims=True)
    return xc * lax.rsqrt(var + LN_EPS) * g + b


def _matmul(x_f32, w_bf16, b_f32):
    # bf16 MXU operands, f32 accumulation.
    return jnp.dot(x_f32.astype(jnp.bfloat16), w_bf16,
                   preferred_element_type=jnp.float32) + b_f32


def _gelu(y):
    # TODO(synk): HF BERT 'gelu' is erf-exact; tanh approximation used for guaranteed Mosaic lowering.
    c = math.sqrt(2.0 / math.pi)
    return 0.5 * y * (1.0 + jnp.tanh(c * (y + 0.044715 * (y * y * y))))


# ----------------------------------- fused Pallas kernel --------------------------------
def _bert_fused_kernel(
    emb_ref, mask_ref,
    emb_ln_g_ref, emb_ln_b_ref,
    qkv_w_ref, qkv_b_ref,
    ao_w_ref, ao_b_ref,
    ln1_g_ref, ln1_b_ref,
    i_w_ref, i_b_ref,
    o_w_ref, o_b_ref,
    ln2_g_ref, ln2_b_ref,
    pool_w_ref, pool_b_ref,
    cls_w_ref, cls_b_ref,
    out_ref,
):
    H = HIDDEN

    # embeddings (word+pos+type summed in wrapper) -> LayerNorm, on the merged (B*S, H) slab
    x = _layernorm(emb_ref[...].astype(jnp.float32),
                   emb_ln_g_ref[...].astype(jnp.float32),
                   emb_ln_b_ref[...].astype(jnp.float32))            # (B*S, H)

    mask_full = mask_ref[...].astype(jnp.float32)                    # (B*NH*S, S) additive bias

    for l in range(N_LAYERS):                                        # static unrolled layer loop
        # fused Q/K/V projection for all tokens of all batch elems: one lane-dense MXU push
        qkv = _matmul(x, qkv_w_ref[l], qkv_b_ref[l].astype(jnp.float32))   # (B*S, 3H) f32
        qkv_bf = qkv.astype(jnp.bfloat16)                            # single hoisted cast

        # per-(batch, head) scores; attention scale is pre-folded into the Q weight columns
        score_parts = []
        for b in range(BATCH):
            r0 = b * SEQ
            for h in range(N_HEADS):
                lo = h * HEAD_DIM
                qh = qkv_bf[r0:r0 + SEQ, lo:lo + HEAD_DIM]                    # (S, dH)
                kh = qkv_bf[r0:r0 + SEQ, H + lo:H + lo + HEAD_DIM]            # (S, dH)
                # contract last axes directly -> no explicit transpose of K
                score_parts.append(
                    lax.dot_general(qh, kh, (((1,), (1,)), ((), ())),
                                    preferred_element_type=jnp.float32))      # (S, S)

        # stacked softmax: one max/exp/sum/approx-reciprocal pass over all B*NH*S sublanes
        s = jnp.concatenate(score_parts, axis=0) + mask_full         # (B*NH*S, S)
        s = s - jnp.max(s, axis=-1, keepdims=True)
        p = jnp.exp(s)
        p = p * pl.reciprocal(jnp.sum(p, axis=-1, keepdims=True), approx=True)
        p_bf = p.astype(jnp.bfloat16)

        # per-(batch, head) PV matmuls, reassembled back into the (B*S, H) slab
        ctx_rows = []
        for b in range(BATCH):
            r0 = b * SEQ
            head_parts = []
            for h in range(N_HEADS):
                lo = h * HEAD_DIM
                rs = (b * N_HEADS + h) * SEQ
                vh = qkv_bf[r0:r0 + SEQ, 2 * H + lo:2 * H + lo + HEAD_DIM]    # (S, dH)
                head_parts.append(jnp.dot(p_bf[rs:rs + SEQ, :], vh,
                                          preferred_element_type=jnp.float32))  # (S, dH)
            ctx_rows.append(jnp.concatenate(head_parts, axis=1))     # (S, H)
        ctx = jnp.concatenate(ctx_rows, axis=0)                      # (B*S, H)

        # attention output projection + residual + LayerNorm (whole slab)
        attn_out = _matmul(ctx, ao_w_ref[l], ao_b_ref[l].astype(jnp.float32))
        x = _layernorm(attn_out + x,
                       ln1_g_ref[l].astype(jnp.float32),
                       ln1_b_ref[l].astype(jnp.float32))

        # FFN: (B*S,H)->(B*S,I) gelu ->(B*S,H), residual + LayerNorm
        inter = _gelu(_matmul(x, i_w_ref[l], i_b_ref[l].astype(jnp.float32)))
        mlp_out = _matmul(inter, o_w_ref[l], o_b_ref[l].astype(jnp.float32))
        x = _layernorm(mlp_out + x,
                       ln2_g_ref[l].astype(jnp.float32),
                       ln2_b_ref[l].astype(jnp.float32))

    # pooler (tanh on every batch element's [CLS] hidden state) + classifier, one matmul each
    cls_tok = jnp.concatenate([x[b * SEQ:b * SEQ + 1, :] for b in range(BATCH)],
                              axis=0)                                            # (B, H)
    pooled = jnp.tanh(_matmul(cls_tok, pool_w_ref[...],
                              pool_b_ref[...].astype(jnp.float32)))              # (B, H)
    logits = _matmul(pooled, cls_w_ref[...], cls_b_ref[...].astype(jnp.float32)) # (B, CLS_PAD)
    out_ref[...] = logits.astype(out_ref.dtype)


# ------------------------------- parameters (deterministic) ----------------------------
def init_params(key):
    keys = iter(jax.random.split(key, 64))

    def w(shape, scale=0.02):
        return (scale * jax.random.normal(next(keys), shape)).astype(jnp.float32)

    bf16 = lambda a: a.astype(jnp.bfloat16)
    zeros = lambda s: jnp.zeros(s, jnp.float32)
    ones = lambda s: jnp.ones(s, jnp.float32)

    qkv_w, ao_w, i_w, o_w = [], [], [], []
    ln1_g, ln1_b, ln2_g, ln2_b = [], [], [], []
    for _ in range(N_LAYERS):
        # fused Q/K/V weight (stored (in, out): kernel computes x @ W + b); the attention
        # scale 1/sqrt(head_dim) is folded into the Q columns (Q bias is zero here,
        # otherwise it would need the same scaling).
        q_w = w((HIDDEN, HIDDEN)) * ATTN_SCALE
        k_w = w((HIDDEN, HIDDEN))
        v_w = w((HIDDEN, HIDDEN))
        qkv_w.append(jnp.concatenate([q_w, k_w, v_w], axis=1))
        ao_w.append(w((HIDDEN, HIDDEN)))
        i_w.append(w((HIDDEN, INTERMEDIATE)))
        o_w.append(w((INTERMEDIATE, HIDDEN)))
        ln1_g.append(ones((1, HIDDEN))); ln1_b.append(zeros((1, HIDDEN)))
        ln2_g.append(ones((1, HIDDEN))); ln2_b.append(zeros((1, HIDDEN)))

    return {
        "word_emb": w((VOCAB, HIDDEN)),
        "pos_emb": w((MAX_POS, HIDDEN)),
        "type_emb": w((N_TYPES, HIDDEN)),
        "emb_ln_g": ones((1, HIDDEN)),
        "emb_ln_b": zeros((1, HIDDEN)),
        # MXU-facing weights pre-cast to bf16 once here (no per-call cast / extra HBM copy)
        "qkv_w": bf16(jnp.stack(qkv_w)), "qkv_b": zeros((N_LAYERS, 1, 3 * HIDDEN)),
        "ao_w": bf16(jnp.stack(ao_w)), "ao_b": zeros((N_LAYERS, 1, HIDDEN)),
        "ln1_g": jnp.stack(ln1_g), "ln1_b": jnp.stack(ln1_b),
        "i_w": bf16(jnp.stack(i_w)), "i_b": zeros((N_LAYERS, 1, INTERMEDIATE)),
        "o_w": bf16(jnp.stack(o_w)), "o_b": zeros((N_LAYERS, 1, HIDDEN)),
        "ln2_g": jnp.stack(ln2_g), "ln2_b": jnp.stack(ln2_b),
        "pool_w": bf16(w((HIDDEN, HIDDEN))),
        "pool_b": zeros((1, HIDDEN)),
        # classifier padded to a lane-dense 128-wide output; real logits = first N_CLASSES lanes
        "cls_w": bf16(jnp.pad(w((HIDDEN, N_CLASSES)), ((0, 0), (0, CLS_PAD - N_CLASSES)))),
        "cls_b": zeros((1, CLS_PAD)),
    }


# ------------------------------------- forward pass ------------------------------------
def bert_classifier_forward(params, token_ids, type_ids, attn_mask):
    B, S = token_ids.shape
    assert B == BATCH and S == SEQ

    # Embedding gathers are glue (XLA); sum word + position + type embeddings, then merge
    # batch and sequence into one (B*S, H) token slab for the kernel.
    emb = (jnp.take(params["word_emb"], token_ids, axis=0)
           + params["pos_emb"][:S][None, :, :]
           + jnp.take(params["type_emb"], type_ids, axis=0)).astype(jnp.float32)   # (B, S, H)
    emb_slab = emb.reshape(B * S, HIDDEN)                                           # (B*S, H)

    # Additive attention-mask bias, pre-broadcast to the stacked (B*NH*S, S) score layout
    # used by the in-kernel batched softmax (tiny: 64x8 f32).
    mask_bias = (1.0 - attn_mask.astype(jnp.float32)) * -10000.0                    # (B, S)
    mask_full = jnp.broadcast_to(mask_bias[:, None, None, :],
                                 (B, N_HEADS, S, S)).reshape(B * N_HEADS * S, S)

    weights = [
        params["emb_ln_g"], params["emb_ln_b"],
        params["qkv_w"], params["qkv_b"],
        params["ao_w"], params["ao_b"],
        params["ln1_g"], params["ln1_b"],
        params["i_w"], params["i_b"],
        params["o_w"], params["o_b"],
        params["ln2_g"], params["ln2_b"],
        params["pool_w"], params["pool_b"],
        params["cls_w"], params["cls_b"],
    ]

    # Single grid-less pallas_call: the whole model is one kernel invocation; activations
    # and all weights (~150 KB total at this config) are VMEM-resident for its duration,
    # so there is no per-grid-step pipeline overhead and no double-buffered weight copies.
    out = pl.pallas_call(
        _bert_fused_kernel,
        out_shape=jax.ShapeDtypeStruct((B, CLS_PAD), jnp.float32),
    )(emb_slab, mask_full, *weights)

    return out[:, :N_CLASSES]


# ----------------------------------------- main -----------------------------------------
if __name__ == "__main__":
    root = jax.random.PRNGKey(0)
    k_params, k_ids = jax.random.split(root)

    params = init_params(k_params)

    token_ids = jax.random.randint(k_ids, (BATCH, SEQ), 0, VOCAB, dtype=jnp.int32)
    type_ids = jnp.zeros((BATCH, SEQ), dtype=jnp.int32)
    # second example has 2 padding positions masked out
    attn_mask = jnp.array([[1] * SEQ, [1] * (SEQ - 2) + [0, 0]], dtype=jnp.int32)

    forward = jax.jit(bert_classifier_forward)
    logits = jax.block_until_ready(forward(params, token_ids, type_ids, attn_mask))

    assert logits.shape == (BATCH, N_CLASSES)
    assert bool(jnp.all(jnp.isfinite(logits)))
    print("KERNEL_OK")
</pallas_src>

<mosaic_0001>
module attributes {stable_mosaic.version = 11 : i64} {
  func.func @_bert_fused_kernel(%arg0: memref<16x64xf32, #tpu.memory_space<vmem>>, %arg1: memref<64x8xf32, #tpu.memory_space<vmem>>, %arg2: memref<1x64xf32, #tpu.memory_space<vmem>>, %arg3: memref<1x64xf32, #tpu.memory_space<vmem>>, %arg4: memref<2x64x192xbf16, #tpu.memory_space<vmem>>, %arg5: memref<2x1x192xf32, #tpu.memory_space<vmem>>, %arg6: memref<2x64x64xbf16, #tpu.memory_space<vmem>>, %arg7: memref<2x1x64xf32, #tpu.memory_space<vmem>>, %arg8: memref<2x1x64xf32, #tpu.memory_space<vmem>>, %arg9: memref<2x1x64xf32, #tpu.memory_space<vmem>>, %arg10: memref<2x64x128xbf16, #tpu.memory_space<vmem>>, %arg11: memref<2x1x128xf32, #tpu.memory_space<vmem>>, %arg12: memref<2x128x64xbf16, #tpu.memory_space<vmem>>, %arg13: memref<2x1x64xf32, #tpu.memory_space<vmem>>, %arg14: memref<2x1x64xf32, #tpu.memory_space<vmem>>, %arg15: memref<2x1x64xf32, #tpu.memory_space<vmem>>, %arg16: memref<64x64xbf16, #tpu.memory_space<vmem>>, %arg17: memref<1x64xf32, #tpu.memory_space<vmem>>, %arg18: memref<64x128xbf16, #tpu.memory_space<vmem>>, %arg19: memref<1x128xf32, #tpu.memory_space<vmem>>, %arg20: memref<2x128xf32, #tpu.memory_space<vmem>>) attributes {dimension_semantics = [], scalar_prefetch = 0 : i64, scratch_operands = 0 : i64, tpu.core_type = #tpu.core_type<tc>} {
    %c0 = arith.constant 0 : index
    %c0_0 = arith.constant 0 : index
    %0 = vector.load %arg0[%c0, %c0_0] : memref<16x64xf32, #tpu.memory_space<vmem>>, vector<16x64xf32>
    %c0_1 = arith.constant 0 : index
    %c0_2 = arith.constant 0 : index
    %1 = vector.load %arg2[%c0_1, %c0_2] : memref<1x64xf32, #tpu.memory_space<vmem>>, vector<1x64xf32>
    %c0_3 = arith.constant 0 : index
    %c0_4 = arith.constant 0 : index
    %2 = vector.load %arg3[%c0_3, %c0_4] : memref<1x64xf32, #tpu.memory_space<vmem>>, vector<1x64xf32>
    %cst = arith.constant dense<0.000000e+00> : vector<16xf32>
    %3 = vector.multi_reduction <add>, %0, %cst [1] : vector<16x64xf32> to vector<16xf32>
    %4 = vector.shape_cast %3 : vector<16xf32> to vector<16x1xf32>
    %cst_5 = arith.constant 6.400000e+01 : f32
    %5 = vector.broadcast %cst_5 : f32 to vector<16x1xf32>
    %6 = arith.divf %4, %5 : vector<16x1xf32>
    %7 = vector.broadcast %6 : vector<16x1xf32> to vector<16x64xf32>
    %8 = arith.subf %0, %7 : vector<16x64xf32>
    %9 = arith.mulf %8, %8 : vector<16x64xf32>
    %cst_6 = arith.constant dense<0.000000e+00> : vector<16xf32>
    %10 = vector.multi_reduction <add>, %9, %cst_6 [1] : vector<16x64xf32> to vector<16xf32>
    %11 = vector.shape_cast %10 : vector<16xf32> to vector<16x1xf32>
    %cst_7 = arith.constant 6.400000e+01 : f32
    %12 = vector.broadcast %cst_7 : f32 to vector<16x1xf32>
    %13 = arith.divf %11, %12 : vector<16x1xf32>
    %cst_8 = arith.constant 9.99999996E-13 : f32
    %14 = vector.broadcast %cst_8 : f32 to vector<16x1xf32>
    %15 = arith.addf %13, %14 : vector<16x1xf32>
    %16 = math.rsqrt %15 : vector<16x1xf32>
    %17 = vector.broadcast %16 : vector<16x1xf32> to vector<16x64xf32>
    %18 = arith.mulf %8, %17 : vector<16x64xf32>
    %19 = vector.broadcast %1 : vector<1x64xf32> to vector<16x64xf32>
    %20 = arith.mulf %18, %19 : vector<16x64xf32>
    %21 = vector.broadcast %2 : vector<1x64xf32> to vector<16x64xf32>
    %22 = arith.addf %20, %21 : vector<16x64xf32>
    %c0_9 = arith.constant 0 : index
    %c0_10 = arith.constant 0 : index
    %23 = vector.load %arg1[%c0_9, %c0_10] : memref<64x8xf32, #tpu.memory_space<vmem>>, vector<64x8xf32>
    %c0_11 = arith.constant 0 : index
    %c0_12 = arith.constant 0 : index
    %c0_13 = arith.constant 0 : index
    %24 = vector.load %arg4[%c0_11, %c0_12, %c0_13] : memref<2x64x192xbf16, #tpu.memory_space<vmem>>, vector<1x64x192xbf16>
    %25 = vector.shape_cast %24 : vector<1x64x192xbf16> to vector<64x192xbf16>
    %c0_14 = arith.constant 0 : index
    %c0_15 = arith.constant 0 : index
    %c0_16 = arith.constant 0 : index
    %26 = vector.load %arg5[%c0_14, %c0_15, %c0_16] : memref<2x1x192xf32, #tpu.memory_space<vmem>>, vector<1x1x192xf32>
    %27 = vector.shape_cast %26 : vector<1x1x192xf32> to vector<1x192xf32>
    %28 = arith.truncf %22 : vector<16x64xf32> to vector<16x64xbf16>
    %cst_17 = arith.constant dense<0.000000e+00> : vector<16x192xf32>
    %29 = tpu.matmul %28, %25, %cst_17 {dimension_numbers = #tpu.dot_dimension_numbers<[1], [0], [0], [1], [0, 0, 1, 1], [], []>} : vector<16x64xbf16>, vector<64x192xbf16>, vector<16x192xf32> -> vector<16x192xf32>
    %30 = vector.broadcast %27 : vector<1x192xf32> to vector<16x192xf32>
    %31 = arith.addf %29, %30 : vector<16x192xf32>
    %32 = arith.truncf %31 : vector<16x192xf32> to vector<16x192xbf16>
    %33 = vector.extract_strided_slice %32 {offsets = [0, 0], sizes = [8, 16], strides = [1, 1]} : vector<16x192xbf16> to vector<8x16xbf16>
    %34 = vector.extract_strided_slice %32 {offsets = [0, 64], sizes = [8, 16], strides = [1, 1]} : vector<16x192xbf16> to vector<8x16xbf16>
    %cst_18 = arith.constant dense<0.000000e+00> : vector<8x8xf32>
    %35 = tpu.matmul %33, %34, %cst_18 {dimension_numbers = #tpu.dot_dimension_numbers<[1], [1], [0], [0], [0, 0, 1, 0], [], []>} : vector<8x16xbf16>, vector<8x16xbf16>, vector<8x8xf32> -> vector<8x8xf32>
    %36 = vector.extract_strided_slice %32 {offsets = [0, 16], sizes = [8, 16], strides = [1, 1]} : vector<16x192xbf16> to vector<8x16xbf16>
    %37 = vector.extract_strided_slice %32 {offsets = [0, 80], sizes = [8, 16], strides = [1, 1]} : vector<16x192xbf16> to vector<8x16xbf16>
    %cst_19 = arith.constant dense<0.000000e+00> : vector<8x8xf32>
    %38 = tpu.matmul %36, %37, %cst_19 {dimension_numbers = #tpu.dot_dimension_numbers<[1], [1], [0], [0], [0, 0, 1, 0], [], []>} : vector<8x16xbf16>, vector<8x16xbf16>, vector<8x8xf32> -> vector<8x8xf32>
    %39 = vector.extract_strided_slice %32 {offsets = [0, 32], sizes = [8, 16], strides = [1, 1]} : vector<16x192xbf16> to vector<8x16xbf16>
    %40 = vector.extract_strided_slice %32 {offsets = [0, 96], sizes = [8, 16], strides = [1, 1]} : vector<16x192xbf16> to vector<8x16xbf16>
    %cst_20 = arith.constant dense<0.000000e+00> : vector<8x8xf32>
    %41 = tpu.matmul %39, %40, %cst_20 {dimension_numbers = #tpu.dot_dimension_numbers<[1], [1], [0], [0], [0, 0, 1, 0], [], []>} : vector<8x16xbf16>, vector<8x16xbf16>, vector<8x8xf32> -> vector<8x8xf32>
    %42 = vector.extract_strided_slice %32 {offsets = [0, 48], sizes = [8, 16], strides = [1, 1]} : vector<16x192xbf16> to vector<8x16xbf16>
    %43 = vector.extract_strided_slice %32 {offsets = [0, 112], sizes = [8, 16], strides = [1, 1]} : vector<16x192xbf16> to vector<8x16xbf16>
    %cst_21 = arith.constant dense<0.000000e+00> : vector<8x8xf32>
    %44 = tpu.matmul %42, %43, %cst_21 {dimension_numbers = #tpu.dot_dimension_numbers<[1], [1], [0], [0], [0, 0, 1, 0], [], []>} : vector<8x16xbf16>, vector<8x16xbf16>, vector<8x8xf32> -> vector<8x8xf32>
    %45 = vector.extract_strided_slice %32 {offsets = [8, 0], sizes = [8, 16], strides = [1, 1]} : vector<16x192xbf16> to vector<8x16xbf16>
    %46 = vector.extract_strided_slice %32 {offsets = [8, 64], sizes = [8, 16], strides = [1, 1]} : vector<16x192xbf16> to vector<8x16xbf16>
    %cst_22 = arith.constant dense<0.000000e+00> : vector<8x8xf32>
    %47 = tpu.matmul %45, %46, %cst_22 {dimension_numbers = #tpu.dot_dimension_numbers<[1], [1], [0], [0], [0, 0, 1, 0], [], []>} : vector<8x16xbf16>, vector<8x16xbf16>, vector<8x8xf32> -> vector<8x8xf32>
    %48 = vector.extract_strided_slice %32 {offsets = [8, 16], sizes = [8, 16], strides = [1, 1]} : vector<16x192xbf16> to vector<8x16xbf16>
    %49 = vector.extract_strided_slice %32 {offsets = [8, 80], sizes = [8, 16], strides = [1, 1]} : vector<16x192xbf16> to vector<8x16xbf16>
    %cst_23 = arith.constant dense<0.000000e+00> : vector<8x8xf32>
    %50 = tpu.matmul %48, %49, %cst_23 {dimension_numbers = #tpu.dot_dimension_numbers<[1], [1], [0], [0], [0, 0, 1, 0], [], []>} : vector<8x16xbf16>, vector<8x16xbf16>, vector<8x8xf32> -> vector<8x8xf32>
    %51 = vector.extract_strided_slice %32 {offsets = [8, 32], sizes = [8, 16], strides = [1, 1]} : vector<16x192xbf16> to vector<8x16xbf16>
    %52 = vector.extract_strided_slice %32 {offsets = [8, 96], sizes = [8, 16], strides = [1, 1]} : vector<16x192xbf16> to vector<8x16xbf16>
    %cst_24 = arith.constant dense<0.000000e+00> : vector<8x8xf32>
    %53 = tpu.matmul %51, %52, %cst_24 {dimension_numbers = #tpu.dot_dimension_numbers<[1], [1], [0], [0], [0, 0, 1, 0], [], []>} : vector<8x16xbf16>, vector<8x16xbf16>, vector<8x8xf32> -> vector<8x8xf32>
    %54 = vector.extract_strided_slice %32 {offsets = [8, 48], sizes = [8, 16], strides = [1, 1]} : vector<16x192xbf16> to vector<8x16xbf16>
    %55 = vector.extract_strided_slice %32 {offsets = [8, 112], sizes = [8, 16], strides = [1, 1]} : vector<16x192xbf16> to vector<8x16xbf16>
    %cst_25 = arith.constant dense<0.000000e+00> : vector<8x8xf32>
    %56 = tpu.matmul %54, %55, %cst_25 {dimension_numbers = #tpu.dot_dimension_numbers<[1], [1], [0], [0], [0, 0, 1, 0], [], []>} : vector<8x16xbf16>, vector<8x16xbf16>, vector<8x8xf32> -> vector<8x8xf32>
    %57 = tpu.concatenate %35, %38, %41, %44, %47, %50, %53, %56 in 0 : vector<8x8xf32>, vector<8x8xf32>, vector<8x8xf32>, vector<8x8xf32>, vector<8x8xf32>, vector<8x8xf32>, vector<8x8xf32>, vector<8x8xf32> -> vector<64x8xf32>
    %58 = arith.addf %57, %23 : vector<64x8xf32>
    %cst_26 = arith.constant dense<0xFF800000> : vector<64xf32>
    %59 = vector.multi_reduction <maximumf>, %58, %cst_26 [1] : vector<64x8xf32> to vector<64xf32>
    %60 = vector.shape_cast %59 : vector<64xf32> to vector<64x1xf32>
    %61 = vector.broadcast %60 : vector<64x1xf32> to vector<64x8xf32>
    %62 = arith.subf %58, %61 : vector<64x8xf32>
    %63 = math.exp %62 : vector<64x8xf32>
    %cst_27 = arith.constant dense<0.000000e+00> : vector<64xf32>
    %64 = vector.multi_reduction <add>, %63, %cst_27 [1] : vector<64x8xf32> to vector<64xf32>
    %65 = vector.shape_cast %64 : vector<64xf32> to vector<64x1xf32>
    %66 = tpu.reciprocal %65 {approx = true} : vector<64x1xf32> -> vector<64x1xf32>
    %67 = vector.broadcast %66 : vector<64x1xf32> to vector<64x8xf32>
    %68 = arith.mulf %63, %67 : vector<64x8xf32>
    %69 = arith.truncf %68 : vector<64x8xf32> to vector<64x8xbf16>
    %70 = vector.extract_strided_slice %32 {offsets = [0, 128], sizes = [8, 16], strides = [1, 1]} : vector<16x192xbf16> to vector<8x16xbf16>
    %71 = vector.extract_strided_slice %69 {offsets = [0, 0], sizes = [8, 8], strides = [1, 1]} : vector<64x8xbf16> to vector<8x8xbf16>
    %cst_28 = arith.constant dense<0.000000e+00> : vector<8x16xf32>
    %72 = tpu.matmul %71, %70, %cst_28 {dimension_numbers = #tpu.dot_dimension_numbers<[1], [0], [0], [1], [0, 0, 1, 1], [], []>} : vector<8x8xbf16>, vector<8x16xbf16>, vector<8x16xf32> -> vector<8x16xf32>
    %73 = vector.extract_strided_slice %32 {offsets = [0, 144], sizes = [8, 16], strides = [1, 1]} : vector<16x192xbf16> to vector<8x16xbf16>
    %74 = vector.extract_strided_slice %69 {offsets = [8, 0], sizes = [8, 8], strides = [1, 1]} : vector<64x8xbf16> to vector<8x8xbf16>
    %cst_29 = arith.constant dense<0.000000e+00> : vector<8x16xf32>
    %75 = tpu.matmul %74, %73, %cst_29 {dimension_numbers = #tpu.dot_dimension_numbers<[1], [0], [0], [1], [0, 0, 1, 1], [], []>} : vector<8x8xbf16>, vector<8x16xbf16>, vector<8x16xf32> -> vector<8x16xf32>
    %76 = vector.extract_strided_slice %32 {offsets = [0, 160], sizes = [8, 16], strides = [1, 1]} : vector<16x192xbf16> to vector<8x16xbf16>
    %77 = vector.extract_strided_slice %69 {offsets = [16, 0], sizes = [8, 8], strides = [1, 1]} : vector<64x8xbf16> to vector<8x8xbf16>
    %cst_30 = arith.constant dense<0.000000e+00> : vector<8x16xf32>
    %78 = tpu.matmul %77, %76, %cst_30 {dimension_numbers = #tpu.dot_dimension_numbers<[1], [0], [0], [1], [0, 0, 1, 1], [], []>} : vector<8x8xbf16>, vector<8x16xbf16>, vector<8x16xf32> -> vector<8x16xf32>
    %79 = vector.extract_strided_slice %32 {offsets = [0, 176], sizes = [8, 16], strides = [1, 1]} : vector<16x192xbf16> to vector<8x16xbf16>
    %80 = vector.extract_strided_slice %69 {offsets = [24, 0], sizes = [8, 8], strides = [1, 1]} : vector<64x8xbf16> to vector<8x8xbf16>
    %cst_31 = arith.constant dense<0.000000e+00> : vector<8x16xf32>
    %81 = tpu.matmul %80, %79, %cst_31 {dimension_numbers = #tpu.dot_dimension_numbers<[1], [0], [0], [1], [0, 0, 1, 1], [], []>} : vector<8x8xbf16>, vector<8x16xbf16>, vector<8x16xf32> -> vector<8x16xf32>
    %82 = tpu.concatenate %72, %75, %78, %81 in 1 : vector<8x16xf32>, vector<8x16xf32>, vector<8x16xf32>, vector<8x16xf32> -> vector<8x64xf32>
    %83 = vector.extract_strided_slice %32 {offsets = [8, 128], sizes = [8, 16], strides = [1, 1]} : vector<16x192xbf16> to vector<8x16xbf16>
    %84 = vector.extract_strided_slice %69 {offsets = [32, 0], sizes = [8, 8], strides = [1, 1]} : vector<64x8xbf16> to vector<8x8xbf16>
    %cst_32 = arith.constant dense<0.000000e+00> : vector<8x16xf32>
    %85 = tpu.matmul %84, %83, %cst_32 {dimension_numbers = #tpu.dot_dimension_numbers<[1], [0], [0], [1], [0, 0, 1, 1], [], []>} : vector<8x8xbf16>, vector<8x16xbf16>, vector<8x16xf32> -> vector<8x16xf32>
    %86 = vector.extract_strided_slice %32 {offsets = [8, 144], sizes = [8, 16], strides = [1, 1]} : vector<16x192xbf16> to vector<8x16xbf16>
    %87 = vector.extract_strided_slice %69 {offsets = [40, 0], sizes = [8, 8], strides = [1, 1]} : vector<64x8xbf16> to vector<8x8xbf16>
    %cst_33 = arith.constant dense<0.000000e+00> : vector<8x16xf32>
    %88 = tpu.matmul %87, %86, %cst_33 {dimension_numbers = #tpu.dot_dimension_numbers<[1], [0], [0], [1], [0, 0, 1, 1], [], []>} : vector<8x8xbf16>, vector<8x16xbf16>, vector<8x16xf32> -> vector<8x16xf32>
    %89 = vector.extract_strided_slice %32 {offsets = [8, 160], sizes = [8, 16], strides = [1, 1]} : vector<16x192xbf16> to vector<8x16xbf16>
    %90 = vector.extract_strided_slice %69 {offsets = [48, 0], sizes = [8, 8], strides = [1, 1]} : vector<64x8xbf16> to vector<8x8xbf16>
    %cst_34 = arith.constant dense<0.000000e+00> : vector<8x16xf32>
    %91 = tpu.matmul %90, %89, %cst_34 {dimension_numbers = #tpu.dot_dimension_numbers<[1], [0], [0], [1], [0, 0, 1, 1], [], []>} : vector<8x8xbf16>, vector<8x16xbf16>, vector<8x16xf32> -> vector<8x16xf32>
    %92 = vector.extract_strided_slice %32 {offsets = [8, 176], sizes = [8, 16], strides = [1, 1]} : vector<16x192xbf16> to vector<8x16xbf16>
    %93 = vector.extract_strided_slice %69 {offsets = [56, 0], sizes = [8, 8], strides = [1, 1]} : vector<64x8xbf16> to vector<8x8xbf16>
    %cst_35 = arith.constant dense<0.000000e+00> : vector<8x16xf32>
    %94 = tpu.matmul %93, %92, %cst_35 {dimension_numbers = #tpu.dot_dimension_numbers<[1], [0], [0], [1], [0, 0, 1, 1], [], []>} : vector<8x8xbf16>, vector<8x16xbf16>, vector<8x16xf32> -> vector<8x16xf32>
    %95 = tpu.concatenate %85, %88, %91, %94 in 1 : vector<8x16xf32>, vector<8x16xf32>, vector<8x16xf32>, vector<8x16xf32> -> vector<8x64xf32>
    %96 = tpu.concatenate %82, %95 in 0 : vector<8x64xf32>, vector<8x64xf32> -> vector<16x64xf32>
    %c0_36 = arith.constant 0 : index
    %c0_37 = arith.constant 0 : index
    %c0_38 = arith.constant 0 : index
    %97 = vector.load %arg6[%c0_36, %c0_37, %c0_38] : memref<2x64x64xbf16, #tpu.memory_space<vmem>>, vector<1x64x64xbf16>
    %98 = vector.shape_cast %97 : vector<1x64x64xbf16> to vector<64x64xbf16>
    %c0_39 = arith.constant 0 : index
    %c0_40 = arith.constant 0 : index
    %c0_41 = arith.constant 0 : index
    %99 = vector.load %arg7[%c0_39, %c0_40, %c0_41] : memref<2x1x64xf32, #tpu.memory_space<vmem>>, vector<1x1x64xf32>
    %100 = vector.shape_cast %99 : vector<1x1x64xf32> to vector<1x64xf32>
    %101 = arith.truncf %96 : vector<16x64xf32> to vector<16x64xbf16>
    %cst_42 = arith.constant dense<0.000000e+00> : vector<16x64xf32>
    %102 = tpu.matmul %101, %98, %cst_42 {dimension_numbers = #tpu.dot_dimension_numbers<[1], [0], [0], [1], [0, 0, 1, 1], [], []>} : vector<16x64xbf16>, vector<64x64xbf16>, vector<16x64xf32> -> vector<16x64xf32>
    %103 = vector.broadcast %100 : vector<1x64xf32> to vector<16x64xf32>
    %104 = arith.addf %102, %103 : vector<16x64xf32>
    %105 = arith.addf %104, %22 : vector<16x64xf32>
    %c0_43 = arith.constant 0 : index
    %c0_44 = arith.constant 0 : index
    %c0_45 = arith.constant 0 : index
    %106 = vector.load %arg8[%c0_43, %c0_44, %c0_45] : memref<2x1x64xf32, #tpu.memory_space<vmem>>, vector<1x1x64xf32>
    %107 = vector.shape_cast %106 : vector<1x1x64xf32> to vector<1x64xf32>
    %c0_46 = arith.constant 0 : index
    %c0_47 = arith.constant 0 : index
    %c0_48 = arith.constant 0 : index
    %108 = vector.load %arg9[%c0_46, %c0_47, %c0_48] : memref<2x1x64xf32, #tpu.memory_space<vmem>>, vector<1x1x64xf32>
    %109 = vector.shape_cast %108 : vector<1x1x64xf32> to vector<1x64xf32>
    %cst_49 = arith.constant dense<0.000000e+00> : vector<16xf32>
    %110 = vector.multi_reduction <add>, %105, %cst_49 [1] : vector<16x64xf32> to vector<16xf32>
    %111 = vector.shape_cast %110 : vector<16xf32> to vector<16x1xf32>
    %cst_50 = arith.constant 6.400000e+01 : f32
    %112 = vector.broadcast %cst_50 : f32 to vector<16x1xf32>
    %113 = arith.divf %111, %112 : vector<16x1xf32>
    %114 = vector.broadcast %113 : vector<16x1xf32> to vector<16x64xf32>
    %115 = arith.subf %105, %114 : vector<16x64xf32>
    %116 = arith.mulf %115, %115 : vector<16x64xf32>
    %cst_51 = arith.constant dense<0.000000e+00> : vector<16xf32>
    %117 = vector.multi_reduction <add>, %116, %cst_51 [1] : vector<16x64xf32> to vector<16xf32>
    %118 = vector.shape_cast %117 : vector<16xf32> to vector<16x1xf32>
    %cst_52 = arith.constant 6.400000e+01 : f32
    %119 = vector.broadcast %cst_52 : f32 to vector<16x1xf32>
    %120 = arith.divf %118, %119 : vector<16x1xf32>
    %cst_53 = arith.constant 9.99999996E-13 : f32
    %121 = vector.broadcast %cst_53 : f32 to vector<16x1xf32>
    %122 = arith.addf %120, %121 : vector<16x1xf32>
    %123 = math.rsqrt %122 : vector<16x1xf32>
    %124 = vector.broadcast %123 : vector<16x1xf32> to vector<16x64xf32>
    %125 = arith.mulf %115, %124 : vector<16x64xf32>
    %126 = vector.broadcast %107 : vector<1x64xf32> to vector<16x64xf32>
    %127 = arith.mulf %125, %126 : vector<16x64xf32>
    %128 = vector.broadcast %109 : vector<1x64xf32> to vector<16x64xf32>
    %129 = arith.addf %127, %128 : vector<16x64xf32>
    %c0_54 = arith.constant 0 : index
    %c0_55 = arith.constant 0 : index
    %c0_56 = arith.constant 0 : index
    %130 = vector.load %arg10[%c0_54, %c0_55, %c0_56] : memref<2x64x128xbf16, #tpu.memory_space<vmem>>, vector<1x64x128xbf16>
    %131 = vector.shape_cast %130 : vector<1x64x128xbf16> to vector<64x128xbf16>
    %c0_57 = arith.constant 0 : index
    %c0_58 = arith.constant 0 : index
    %c0_59 = arith.constant 0 : index
    %132 = vector.load %arg11[%c0_57, %c0_58, %c0_59] : memref<2x1x128xf32, #tpu.memory_space<vmem>>, vector<1x1x128xf32>
    %133 = vector.shape_cast %132 : vector<1x1x128xf32> to vector<1x128xf32>
    %134 = arith.truncf %129 : vector<16x64xf32> to vector<16x64xbf16>
    %cst_60 = arith.constant dense<0.000000e+00> : vector<16x128xf32>
    %135 = tpu.matmul %134, %131, %cst_60 {dimension_numbers = #tpu.dot_dimension_numbers<[1], [0], [0], [1], [0, 0, 1, 1], [], []>} : vector<16x64xbf16>, vector<64x128xbf16>, vector<16x128xf32> -> vector<16x128xf32>
    %136 = vector.broadcast %133 : vector<1x128xf32> to vector<16x128xf32>
    %137 = arith.addf %135, %136 : vector<16x128xf32>
    %cst_61 = arith.constant 5.000000e-01 : f32
    %138 = vector.broadcast %cst_61 : f32 to vector<16x128xf32>
    %139 = arith.mulf %138, %137 : vector<16x128xf32>
    %140 = arith.mulf %137, %137 : vector<16x128xf32>
    %141 = arith.mulf %140, %137 : vector<16x128xf32>
    %cst_62 = arith.constant 4.471500e-02 : f32
    %142 = vector.broadcast %cst_62 : f32 to vector<16x128xf32>
    %143 = arith.mulf %142, %141 : vector<16x128xf32>
    %144 = arith.addf %137, %143 : vector<16x128xf32>
    %cst_63 = arith.constant 0.797884583 : f32
    %145 = vector.broadcast %cst_63 : f32 to vector<16x128xf32>
    %146 = arith.mulf %145, %144 : vector<16x128xf32>
    %147 = math.tanh %146 : vector<16x128xf32>
    %cst_64 = arith.constant 1.000000e+00 : f32
    %148 = vector.broadcast %cst_64 : f32 to vector<16x128xf32>
    %149 = arith.addf %148, %147 : vector<16x128xf32>
    %150 = arith.mulf %139, %149 : vector<16x128xf32>
    %c0_65 = arith.constant 0 : index
    %c0_66 = arith.constant 0 : index
    %c0_67 = arith.constant 0 : index
    %151 = vector.load %arg12[%c0_65, %c0_66, %c0_67] : memref<2x128x64xbf16, #tpu.memory_space<vmem>>, vector<1x128x64xbf16>
    %152 = vector.shape_cast %151 : vector<1x128x64xbf16> to vector<128x64xbf16>
    %c0_68 = arith.constant 0 : index
    %c0_69 = arith.constant 0 : index
    %c0_70 = arith.constant 0 : index
    %153 = vector.load %arg13[%c0_68, %c0_69, %c0_70] : memref<2x1x64xf32, #tpu.memory_space<vmem>>, vector<1x1x64xf32>
    %154 = vector.shape_cast %153 : vector<1x1x64xf32> to vector<1x64xf32>
    %155 = arith.truncf %150 : vector<16x128xf32> to vector<16x128xbf16>
    %cst_71 = arith.constant dense<0.000000e+00> : vector<16x64xf32>
    %156 = tpu.matmul %155, %152, %cst_71 {dimension_numbers = #tpu.dot_dimension_numbers<[1], [0], [0], [1], [0, 0, 1, 1], [], []>} : vector<16x128xbf16>, vector<128x64xbf16>, vector<16x64xf32> -> vector<16x64xf32>
    %157 = vector.broadcast %154 : vector<1x64xf32> to vector<16x64xf32>
    %158 = arith.addf %156, %157 : vector<16x64xf32>
    %159 = arith.addf %158, %129 : vector<16x64xf32>
    %c0_72 = arith.constant 0 : index
    %c0_73 = arith.constant 0 : index
    %c0_74 = arith.constant 0 : index
    %160 = vector.load %arg14[%c0_72, %c0_73, %c0_74] : memref<2x1x64xf32, #tpu.memory_space<vmem>>, vector<1x1x64xf32>
    %161 = vector.shape_cast %160 : vector<1x1x64xf32> to vector<1x64xf32>
    %c0_75 = arith.constant 0 : index
    %c0_76 = arith.constant 0 : index
    %c0_77 = arith.constant 0 : index
    %162 = vector.load %arg15[%c0_75, %c0_76, %c0_77] : memref<2x1x64xf32, #tpu.memory_space<vmem>>, vector<1x1x64xf32>
    %163 = vector.shape_cast %162 : vector<1x1x64xf32> to vector<1x64xf32>
    %cst_78 = arith.constant dense<0.000000e+00> : vector<16xf32>
    %164 = vector.multi_reduction <add>, %159, %cst_78 [1] : vector<16x64xf32> to vector<16xf32>
    %165 = vector.shape_cast %164 : vector<16xf32> to vector<16x1xf32>
    %cst_79 = arith.constant 6.400000e+01 : f32
    %166 = vector.broadcast %cst_79 : f32 to vector<16x1xf32>
    %167 = arith.divf %165, %166 : vector<16x1xf32>
    %168 = vector.broadcast %167 : vector<16x1xf32> to vector<16x64xf32>
    %169 = arith.subf %159, %168 : vector<16x64xf32>
    %170 = arith.mulf %169, %169 : vector<16x64xf32>
    %cst_80 = arith.constant dense<0.000000e+00> : vector<16xf32>
    %171 = vector.multi_reduction <add>, %170, %cst_80 [1] : vector<16x64xf32> to vector<16xf32>
    %172 = vector.shape_cast %171 : vector<16xf32> to vector<16x1xf32>
    %cst_81 = arith.constant 6.400000e+01 : f32
    %173 = vector.broadcast %cst_81 : f32 to vector<16x1xf32>
    %174 = arith.divf %172, %173 : vector<16x1xf32>
    %cst_82 = arith.constant 9.99999996E-13 : f32
    %175 = vector.broadcast %cst_82 : f32 to vector<16x1xf32>
    %176 = arith.addf %174, %175 : vector<16x1xf32>
    %177 = math.rsqrt %176 : vector<16x1xf32>
    %178 = vector.broadcast %177 : vector<16x1xf32> to vector<16x64xf32>
    %179 = arith.mulf %169, %178 : vector<16x64xf32>
    %180 = vector.broadcast %161 : vector<1x64xf32> to vector<16x64xf32>
    %181 = arith.mulf %179, %180 : vector<16x64xf32>
    %182 = vector.broadcast %163 : vector<1x64xf32> to vector<16x64xf32>
    %183 = arith.addf %181, %182 : vector<16x64xf32>
    %c1 = arith.constant 1 : index
    %c0_83 = arith.constant 0 : index
    %c0_84 = arith.constant 0 : index
    %184 = vector.load %arg4[%c1, %c0_83, %c0_84] : memref<2x64x192xbf16, #tpu.memory_space<vmem>>, vector<1x64x192xbf16>
    %185 = vector.shape_cast %184 : vector<1x64x192xbf16> to vector<64x192xbf16>
    %c1_85 = arith.constant 1 : index
    %c0_86 = arith.constant 0 : index
    %c0_87 = arith.constant 0 : index
    %186 = vector.load %arg5[%c1_85, %c0_86, %c0_87] : memref<2x1x192xf32, #tpu.memory_space<vmem>>, vector<1x1x192xf32>
    %187 = vector.shape_cast %186 : vector<1x1x192xf32> to vector<1x192xf32>
    %188 = arith.truncf %183 : vector<16x64xf32> to vector<16x64xbf16>
    %cst_88 = arith.constant dense<0.000000e+00> : vector<16x192xf32>
    %189 = tpu.matmul %188, %185, %cst_88 {dimension_numbers = #tpu.dot_dimension_numbers<[1], [0], [0], [1], [0, 0, 1, 1], [], []>} : vector<16x64xbf16>, vector<64x192xbf16>, vector<16x192xf32> -> vector<16x192xf32>
    %190 = vector.broadcast %187 : vector<1x192xf32> to vector<16x192xf32>
    %191 = arith.addf %189, %190 : vector<16x192xf32>
    %192 = arith.truncf %191 : vector<16x192xf32> to vector<16x192xbf16>
    %193 = vector.extract_strided_slice %192 {offsets = [0, 0], sizes = [8, 16], strides = [1, 1]} : vector<16x192xbf16> to vector<8x16xbf16>
    %194 = vector.extract_strided_slice %192 {offsets = [0, 64], sizes = [8, 16], strides = [1, 1]} : vector<16x192xbf16> to vector<8x16xbf16>
    %cst_89 = arith.constant dense<0.000000e+00> : vector<8x8xf32>
    %195 = tpu.matmul %193, %194, %cst_89 {dimension_numbers = #tpu.dot_dimension_numbers<[1], [1], [0], [0], [0, 0, 1, 0], [], []>} : vector<8x16xbf16>, vector<8x16xbf16>, vector<8x8xf32> -> vector<8x8xf32>
    %196 = vector.extract_strided_slice %192 {offsets = [0, 16], sizes = [8, 16], strides = [1, 1]} : vector<16x192xbf16> to vector<8x16xbf16>
    %197 = vector.extract_strided_slice %192 {offsets = [0, 80], sizes = [8, 16], strides = [1, 1]} : vector<16x192xbf16> to vector<8x16xbf16>
    %cst_90 = arith.constant dense<0.000000e+00> : vector<8x8xf32>
    %198 = tpu.matmul %196, %197, %cst_90 {dimension_numbers = #tpu.dot_dimension_numbers<[1], [1], [0], [0], [0, 0, 1, 0], [], []>} : vector<8x16xbf16>, vector<8x16xbf16>, vector<8x8xf32> -> vector<8x8xf32>
    %199 = vector.extract_strided_slice %192 {offsets = [0, 32], sizes = [8, 16], strides = [1, 1]} : vector<16x192xbf16> to vector<8x16xbf16>
    %200 = vector.extract_strided_slice %192 {offsets = [0, 96], sizes = [8, 16], strides = [1, 1]} : vector<16x192xbf16> to vector<8x16xbf16>
    %cst_91 = arith.constant dense<0.000000e+00> : vector<8x8xf32>
    %201 = tpu.matmul %199, %200, %cst_91 {dimension_numbers = #tpu.dot_dimension_numbers<[1], [1], [0], [0], [0, 0, 1, 0], [], []>} : vector<8x16xbf16>, vector<8x16xbf16>, vector<8x8xf32> -> vector<8x8xf32>
    %202 = vector.extract_strided_slice %192 {offsets = [0, 48], sizes = [8, 16], strides = [1, 1]} : vector<16x192xbf16> to vector<8x16xbf16>
    %203 = vector.extract_strided_slice %192 {offsets = [0, 112], sizes = [8, 16], strides = [1, 1]} : vector<16x192xbf16> to vector<8x16xbf16>
    %cst_92 = arith.constant dense<0.000000e+00> : vector<8x8xf32>
    %204 = tpu.matmul %202, %203, %cst_92 {dimension_numbers = #tpu.dot_dimension_numbers<[1], [1], [0], [0], [0, 0, 1, 0], [], []>} : vector<8x16xbf16>, vector<8x16xbf16>, vector<8x8xf32> -> vector<8x8xf32>
    %205 = vector.extract_strided_slice %192 {offsets = [8, 0], sizes = [8, 16], strides = [1, 1]} : vector<16x192xbf16> to vector<8x16xbf16>
    %206 = vector.extract_strided_slice %192 {offsets = [8, 64], sizes = [8, 16], strides = [1, 1]} : vector<16x192xbf16> to vector<8x16xbf16>
    %cst_93 = arith.constant dense<0.000000e+00> : vector<8x8xf32>
    %207 = tpu.matmul %205, %206, %cst_93 {dimension_numbers = #tpu.dot_dimension_numbers<[1], [1], [0], [0], [0, 0, 1, 0], [], []>} : vector<8x16xbf16>, vector<8x16xbf16>, vector<8x8xf32> -> vector<8x8xf32>
    %208 = vector.extract_strided_slice %192 {offsets = [8, 16], sizes = [8, 16], strides = [1, 1]} : vector<16x192xbf16> to vector<8x16xbf16>
    %209 = vector.extract_strided_slice %192 {offsets = [8, 80], sizes = [8, 16], strides = [1, 1]} : vector<16x192xbf16> to vector<8x16xbf16>
    %cst_94 = arith.constant dense<0.000000e+00> : vector<8x8xf32>
    %210 = tpu.matmul %208, %209, %cst_94 {dimension_numbers = #tpu.dot_dimension_numbers<[1], [1], [0], [0], [0, 0, 1, 0], [], []>} : vector<8x16xbf16>, vector<8x16xbf16>, vector<8x8xf32> -> vector<8x8xf32>
    %211 = vector.extract_strided_slice %192 {offsets = [8, 32], sizes = [8, 16], strides = [1, 1]} : vector<16x192xbf16> to vector<8x16xbf16>
    %212 = vector.extract_strided_slice %192 {offsets = [8, 96], sizes = [8, 16], strides = [1, 1]} : vector<16x192xbf16> to vector<8x16xbf16>
    %cst_95 = arith.constant dense<0.000000e+00> : vector<8x8xf32>
    %213 = tpu.matmul %211, %212, %cst_95 {dimension_numbers = #tpu.dot_dimension_numbers<[1], [1], [0], [0], [0, 0, 1, 0], [], []>} : vector<8x16xbf16>, vector<8x16xbf16>, vector<8x8xf32> -> vector<8x8xf32>
    %214 = vector.extract_strided_slice %192 {offsets = [8, 48], sizes = [8, 16], strides = [1, 1]} : vector<16x192xbf16> to vector<8x16xbf16>
    %215 = vector.extract_strided_slice %192 {offsets = [8, 112], sizes = [8, 16], strides = [1, 1]} : vector<16x192xbf16> to vector<8x16xbf16>
    %cst_96 = arith.constant dense<0.000000e+00> : vector<8x8xf32>
    %216 = tpu.matmul %214, %215, %cst_96 {dimension_numbers = #tpu.dot_dimension_numbers<[1], [1], [0], [0], [0, 0, 1, 0], [], []>} : vector<8x16xbf16>, vector<8x16xbf16>, vector<8x8xf32> -> vector<8x8xf32>
    %217 = tpu.concatenate %195, %198, %201, %204, %207, %210, %213, %216 in 0 : vector<8x8xf32>, vector<8x8xf32>, vector<8x8xf32>, vector<8x8xf32>, vector<8x8xf32>, vector<8x8xf32>, vector<8x8xf32>, vector<8x8xf32> -> vector<64x8xf32>
    %218 = arith.addf %217, %23 : vector<64x8xf32>
    %cst_97 = arith.constant dense<0xFF800000> : vector<64xf32>
    %219 = vector.multi_reduction <maximumf>, %218, %cst_97 [1] : vector<64x8xf32> to vector<64xf32>
    %220 = vector.shape_cast %219 : vector<64xf32> to vector<64x1xf32>
    %221 = vector.broadcast %220 : vector<64x1xf32> to vector<64x8xf32>
    %222 = arith.subf %218, %221 : vector<64x8xf32>
    %223 = math.exp %222 : vector<64x8xf32>
    %cst_98 = arith.constant dense<0.000000e+00> : vector<64xf32>
    %224 = vector.multi_reduction <add>, %223, %cst_98 [1] : vector<64x8xf32> to vector<64xf32>
    %225 = vector.shape_cast %224 : vector<64xf32> to vector<64x1xf32>
    %226 = tpu.reciprocal %225 {approx = true} : vector<64x1xf32> -> vector<64x1xf32>
    %227 = vector.broadcast %226 : vector<64x1xf32> to vector<64x8xf32>
    %228 = arith.mulf %223, %227 : vector<64x8xf32>
    %229 = arith.truncf %228 : vector<64x8xf32> to vector<64x8xbf16>
    %230 = vector.extract_strided_slice %192 {offsets = [0, 128], sizes = [8, 16], strides = [1, 1]} : vector<16x192xbf16> to vector<8x16xbf16>
    %231 = vector.extract_strided_slice %229 {offsets = [0, 0], sizes = [8, 8], strides = [1, 1]} : vector<64x8xbf16> to vector<8x8xbf16>
    %cst_99 = arith.constant dense<0.000000e+00> : vector<8x16xf32>
    %232 = tpu.matmul %231, %230, %cst_99 {dimension_numbers = #tpu.dot_dimension_numbers<[1], [0], [0], [1], [0, 0, 1, 1], [], []>} : vector<8x8xbf16>, vector<8x16xbf16>, vector<8x16xf32> -> vector<8x16xf32>
    %233 = vector.extract_strided_slice %192 {offsets = [0, 144], sizes = [8, 16], strides = [1, 1]} : vector<16x192xbf16> to vector<8x16xbf16>
    %234 = vector.extract_strided_slice %229 {offsets = [8, 0], sizes = [8, 8], strides = [1, 1]} : vector<64x8xbf16> to vector<8x8xbf16>
    %cst_100 = arith.constant dense<0.000000e+00> : vector<8x16xf32>
    %235 = tpu.matmul %234, %233, %cst_100 {dimension_numbers = #tpu.dot_dimension_numbers<[1], [0], [0], [1], [0, 0, 1, 1], [], []>} : vector<8x8xbf16>, vector<8x16xbf16>, vector<8x16xf32> -> vector<8x16xf32>
    %236 = vector.extract_strided_slice %192 {offsets = [0, 160], sizes = [8, 16], strides = [1, 1]} : vector<16x192xbf16> to vector<8x16xbf16>
    %237 = vector.extract_strided_slice %229 {offsets = [16, 0], sizes = [8, 8], strides = [1, 1]} : vector<64x8xbf16> to vector<8x8xbf16>
    %cst_101 = arith.constant dense<0.000000e+00> : vector<8x16xf32>
    %238 = tpu.matmul %237, %236, %cst_101 {dimension_numbers = #tpu.dot_dimension_numbers<[1], [0], [0], [1], [0, 0, 1, 1], [], []>} : vector<8x8xbf16>, vector<8x16xbf16>, vector<8x16xf32> -> vector<8x16xf32>
    %239 = vector.extract_strided_slice %192 {offsets = [0, 176], sizes = [8, 16], strides = [1, 1]} : vector<16x192xbf16> to vector<8x16xbf16>
    %240 = vector.extract_strided_slice %229 {offsets = [24, 0], sizes = [8, 8], strides = [1, 1]} : vector<64x8xbf16> to vector<8x8xbf16>
    %cst_102 = arith.constant dense<0.000000e+00> : vector<8x16xf32>
    %241 = tpu.matmul %240, %239, %cst_102 {dimension_numbers = #tpu.dot_dimension_numbers<[1], [0], [0], [1], [0, 0, 1, 1], [], []>} : vector<8x8xbf16>, vector<8x16xbf16>, vector<8x16xf32> -> vector<8x16xf32>
    %242 = tpu.concatenate %232, %235, %238, %241 in 1 : vector<8x16xf32>, vector<8x16xf32>, vector<8x16xf32>, vector<8x16xf32> -> vector<8x64xf32>
    %243 = vector.extract_strided_slice %192 {offsets = [8, 128], sizes = [8, 16], strides = [1, 1]} : vector<16x192xbf16> to vector<8x16xbf16>
    %244 = vector.extract_strided_slice %229 {offsets = [32, 0], sizes = [8, 8], strides = [1, 1]} : vector<64x8xbf16> to vector<8x8xbf16>
    %cst_103 = arith.constant dense<0.000000e+00> : vector<8x16xf32>
    %245 = tpu.matmul %244, %243, %cst_103 {dimension_numbers = #tpu.dot_dimension_numbers<[1], [0], [0], [1], [0, 0, 1, 1], [], []>} : vector<8x8xbf16>, vector<8x16xbf16>, vector<8x16xf32> -> vector<8x16xf32>
    %246 = vector.extract_strided_slice %192 {offsets = [8, 144], sizes = [8, 16], strides = [1, 1]} : vector<16x192xbf16> to vector<8x16xbf16>
    %247 = vector.extract_strided_slice %229 {offsets = [40, 0], sizes = [8, 8], strides = [1, 1]} : vector<64x8xbf16> to vector<8x8xbf16>
    %cst_104 = arith.constant dense<0.000000e+00> : vector<8x16xf32>
    %248 = tpu.matmul %247, %246, %cst_104 {dimension_numbers = #tpu.dot_dimension_numbers<[1], [0], [0], [1], [0, 0, 1, 1], [], []>} : vector<8x8xbf16>, vector<8x16xbf16>, vector<8x16xf32> -> vector<8x16xf32>
    %249 = vector.extract_strided_slice %192 {offsets = [8, 160], sizes = [8, 16], strides = [1, 1]} : vector<16x192xbf16> to vector<8x16xbf16>
    %250 = vector.extract_strided_slice %229 {offsets = [48, 0], sizes = [8, 8], strides = [1, 1]} : vector<64x8xbf16> to vector<8x8xbf16>
    %cst_105 = arith.constant dense<0.000000e+00> : vector<8x16xf32>
    %251 = tpu.matmul %250, %249, %cst_105 {dimension_numbers = #tpu.dot_dimension_numbers<[1], [0], [0], [1], [0, 0, 1, 1], [], []>} : vector<8x8xbf16>, vector<8x16xbf16>, vector<8x16xf32> -> vector<8x16xf32>
    %252 = vector.extract_strided_slice %192 {offsets = [8, 176], sizes = [8, 16], strides = [1, 1]} : vector<16x192xbf16> to vector<8x16xbf16>
    %253 = vector.extract_strided_slice %229 {offsets = [56, 0], sizes = [8, 8], strides = [1, 1]} : vector<64x8xbf16> to vector<8x8xbf16>
    %cst_106 = arith.constant dense<0.000000e+00> : vector<8x16xf32>
    %254 = tpu.matmul %253, %252, %cst_106 {dimension_numbers = #tpu.dot_dimension_numbers<[1], [0], [0], [1], [0, 0, 1, 1], [], []>} : vector<8x8xbf16>, vector<8x16xbf16>, vector<8x16xf32> -> vector<8x16xf32>
    %255 = tpu.concatenate %245, %248, %251, %254 in 1 : vector<8x16xf32>, vector<8x16xf32>, vector<8x16xf32>, vector<8x16xf32> -> vector<8x64xf32>
    %256 = tpu.concatenate %242, %255 in 0 : vector<8x64xf32>, vector<8x64xf32> -> vector<16x64xf32>
    %c1_107 = arith.constant 1 : index
    %c0_108 = arith.constant 0 : index
    %c0_109 = arith.constant 0 : index
    %257 = vector.load %arg6[%c1_107, %c0_108, %c0_109] : memref<2x64x64xbf16, #tpu.memory_space<vmem>>, vector<1x64x64xbf16>
    %258 = vector.shape_cast %257 : vector<1x64x64xbf16> to vector<64x64xbf16>
    %c1_110 = arith.constant 1 : index
    %c0_111 = arith.constant 0 : index
    %c0_112 = arith.constant 0 : index
    %259 = vector.load %arg7[%c1_110, %c0_111, %c0_112] : memref<2x1x64xf32, #tpu.memory_space<vmem>>, vector<1x1x64xf32>
    %260 = vector.shape_cast %259 : vector<1x1x64xf32> to vector<1x64xf32>
    %261 = arith.truncf %256 : vector<16x64xf32> to vector<16x64xbf16>
    %cst_113 = arith.constant dense<0.000000e+00> : vector<16x64xf32>
    %262 = tpu.matmul %261, %258, %cst_113 {dimension_numbers = #tpu.dot_dimension_numbers<[1], [0], [0], [1], [0, 0, 1, 1], [], []>} : vector<16x64xbf16>, vector<64x64xbf16>, vector<16x64xf32> -> vector<16x64xf32>
    %263 = vector.broadcast %260 : vector<1x64xf32> to vector<16x64xf32>
    %264 = arith.addf %262, %263 : vector<16x64xf32>
    %265 = arith.addf %264, %183 : vector<16x64xf32>
    %c1_114 = arith.constant 1 : index
    %c0_115 = arith.constant 0 : index
    %c0_116 = arith.constant 0 : index
    %266 = vector.load %arg8[%c1_114, %c0_115, %c0_116] : memref<2x1x64xf32, #tpu.memory_space<vmem>>, vector<1x1x64xf32>
    %267 = vector.shape_cast %266 : vector<1x1x64xf32> to vector<1x64xf32>
    %c1_117 = arith.constant 1 : index
    %c0_118 = arith.constant 0 : index
    %c0_119 = arith.constant 0 : index
    %268 = vector.load %arg9[%c1_117, %c0_118, %c0_119] : memref<2x1x64xf32, #tpu.memory_space<vmem>>, vector<1x1x64xf32>
    %269 = vector.shape_cast %268 : vector<1x1x64xf32> to vector<1x64xf32>
    %cst_120 = arith.constant dense<0.000000e+00> : vector<16xf32>
    %270 = vector.multi_reduction <add>, %265, %cst_120 [1] : vector<16x64xf32> to vector<16xf32>
    %271 = vector.shape_cast %270 : vector<16xf32> to vector<16x1xf32>
    %cst_121 = arith.constant 6.400000e+01 : f32
    %272 = vector.broadcast %cst_121 : f32 to vector<16x1xf32>
    %273 = arith.divf %271, %272 : vector<16x1xf32>
    %274 = vector.broadcast %273 : vector<16x1xf32> to vector<16x64xf32>
    %275 = arith.subf %265, %274 : vector<16x64xf32>
    %276 = arith.mulf %275, %275 : vector<16x64xf32>
    %cst_122 = arith.constant dense<0.000000e+00> : vector<16xf32>
    %277 = vector.multi_reduction <add>, %276, %cst_122 [1] : vector<16x64xf32> to vector<16xf32>
    %278 = vector.shape_cast %277 : vector<16xf32> to vector<16x1xf32>
    %cst_123 = arith.constant 6.400000e+01 : f32
    %279 = vector.broadcast %cst_123 : f32 to vector<16x1xf32>
    %280 = arith.divf %278, %279 : vector<16x1xf32>
    %cst_124 = arith.constant 9.99999996E-13 : f32
    %281 = vector.broadcast %cst_124 : f32 to vector<16x1xf32>
    %282 = arith.addf %280, %281 : vector<16x1xf32>
    %283 = math.rsqrt %282 : vector<16x1xf32>
    %284 = vector.broadcast %283 : vector<16x1xf32> to vector<16x64xf32>
    %285 = arith.mulf %275, %284 : vector<16x64xf32>
    %286 = vector.broadcast %267 : vector<1x64xf32> to vector<16x64xf32>
    %287 = arith.mulf %285, %286 : vector<16x64xf32>
    %288 = vector.broadcast %269 : vector<1x64xf32> to vector<16x64xf32>
    %289 = arith.addf %287, %288 : vector<16x64xf32>
    %c1_125 = arith.constant 1 : index
    %c0_126 = arith.constant 0 : index
    %c0_127 = arith.constant 0 : index
    %290 = vector.load %arg10[%c1_125, %c0_126, %c0_127] : memref<2x64x128xbf16, #tpu.memory_space<vmem>>, vector<1x64x128xbf16>
    %291 = vector.shape_cast %290 : vector<1x64x128xbf16> to vector<64x128xbf16>
    %c1_128 = arith.constant 1 : index
    %c0_129 = arith.constant 0 : index
    %c0_130 = arith.constant 0 : index
    %292 = vector.load %arg11[%c1_128, %c0_129, %c0_130] : memref<2x1x128xf32, #tpu.memory_space<vmem>>, vector<1x1x128xf32>
    %293 = vector.shape_cast %292 : vector<1x1x128xf32> to vector<1x128xf32>
    %294 = arith.truncf %289 : vector<16x64xf32> to vector<16x64xbf16>
    %cst_131 = arith.constant dense<0.000000e+00> : vector<16x128xf32>
    %295 = tpu.matmul %294, %291, %cst_131 {dimension_numbers = #tpu.dot_dimension_numbers<[1], [0], [0], [1], [0, 0, 1, 1], [], []>} : vector<16x64xbf16>, vector<64x128xbf16>, vector<16x128xf32> -> vector<16x128xf32>
    %296 = vector.broadcast %293 : vector<1x128xf32> to vector<16x128xf32>
    %297 = arith.addf %295, %296 : vector<16x128xf32>
    %cst_132 = arith.constant 5.000000e-01 : f32
    %298 = vector.broadcast %cst_132 : f32 to vector<16x128xf32>
    %299 = arith.mulf %298, %297 : vector<16x128xf32>
    %300 = arith.mulf %297, %297 : vector<16x128xf32>
    %301 = arith.mulf %300, %297 : vector<16x128xf32>
    %cst_133 = arith.constant 4.471500e-02 : f32
    %302 = vector.broadcast %cst_133 : f32 to vector<16x128xf32>
    %303 = arith.mulf %302, %301 : vector<16x128xf32>
    %304 = arith.addf %297, %303 : vector<16x128xf32>
    %cst_134 = arith.constant 0.797884583 : f32
    %305 = vector.broadcast %cst_134 : f32 to vector<16x128xf32>
    %306 = arith.mulf %305, %304 : vector<16x128xf32>
    %307 = math.tanh %306 : vector<16x128xf32>
    %cst_135 = arith.constant 1.000000e+00 : f32
    %308 = vector.broadcast %cst_135 : f32 to vector<16x128xf32>
    %309 = arith.addf %308, %307 : vector<16x128xf32>
    %310 = arith.mulf %299, %309 : vector<16x128xf32>
    %c1_136 = arith.constant 1 : index
    %c0_137 = arith.constant 0 : index
    %c0_138 = arith.constant 0 : index
    %311 = vector.load %arg12[%c1_136, %c0_137, %c0_138] : memref<2x128x64xbf16, #tpu.memory_space<vmem>>, vector<1x128x64xbf16>
    %312 = vector.shape_cast %311 : vector<1x128x64xbf16> to vector<128x64xbf16>
    %c1_139 = arith.constant 1 : index
    %c0_140 = arith.constant 0 : index
    %c0_141 = arith.constant 0 : index
    %313 = vector.load %arg13[%c1_139, %c0_140, %c0_141] : memref<2x1x64xf32, #tpu.memory_space<vmem>>, vector<1x1x64xf32>
    %314 = vector.shape_cast %313 : vector<1x1x64xf32> to vector<1x64xf32>
    %315 = arith.truncf %310 : vector<16x128xf32> to vector<16x128xbf16>
    %cst_142 = arith.constant dense<0.000000e+00> : vector<16x64xf32>
    %316 = tpu.matmul %315, %312, %cst_142 {dimension_numbers = #tpu.dot_dimension_numbers<[1], [0], [0], [1], [0, 0, 1, 1], [], []>} : vector<16x128xbf16>, vector<128x64xbf16>, vector<16x64xf32> -> vector<16x64xf32>
    %317 = vector.broadcast %314 : vector<1x64xf32> to vector<16x64xf32>
    %318 = arith.addf %316, %317 : vector<16x64xf32>
    %319 = arith.addf %318, %289 : vector<16x64xf32>
    %c1_143 = arith.constant 1 : index
    %c0_144 = arith.constant 0 : index
    %c0_145 = arith.constant 0 : index
    %320 = vector.load %arg14[%c1_143, %c0_144, %c0_145] : memref<2x1x64xf32, #tpu.memory_space<vmem>>, vector<1x1x64xf32>
    %321 = vector.shape_cast %320 : vector<1x1x64xf32> to vector<1x64xf32>
    %c1_146 = arith.constant 1 : index
    %c0_147 = arith.constant 0 : index
    %c0_148 = arith.constant 0 : index
    %322 = vector.load %arg15[%c1_146, %c0_147, %c0_148] : memref<2x1x64xf32, #tpu.memory_space<vmem>>, vector<1x1x64xf32>
    %323 = vector.shape_cast %322 : vector<1x1x64xf32> to vector<1x64xf32>
    %cst_149 = arith.constant dense<0.000000e+00> : vector<16xf32>
    %324 = vector.multi_reduction <add>, %319, %cst_149 [1] : vector<16x64xf32> to vector<16xf32>
    %325 = vector.shape_cast %324 : vector<16xf32> to vector<16x1xf32>
    %cst_150 = arith.constant 6.400000e+01 : f32
    %326 = vector.broadcast %cst_150 : f32 to vector<16x1xf32>
    %327 = arith.divf %325, %326 : vector<16x1xf32>
    %328 = vector.broadcast %327 : vector<16x1xf32> to vector<16x64xf32>
    %329 = arith.subf %319, %328 : vector<16x64xf32>
    %330 = arith.mulf %329, %329 : vector<16x64xf32>
    %cst_151 = arith.constant dense<0.000000e+00> : vector<16xf32>
    %331 = vector.multi_reduction <add>, %330, %cst_151 [1] : vector<16x64xf32> to vector<16xf32>
    %332 = vector.shape_cast %331 : vector<16xf32> to vector<16x1xf32>
    %cst_152 = arith.constant 6.400000e+01 : f32
    %333 = vector.broadcast %cst_152 : f32 to vector<16x1xf32>
    %334 = arith.divf %332, %333 : vector<16x1xf32>
    %cst_153 = arith.constant 9.99999996E-13 : f32
    %335 = vector.broadcast %cst_153 : f32 to vector<16x1xf32>
    %336 = arith.addf %334, %335 : vector<16x1xf32>
    %337 = math.rsqrt %336 : vector<16x1xf32>
    %338 = vector.broadcast %337 : vector<16x1xf32> to vector<16x64xf32>
    %339 = arith.mulf %329, %338 : vector<16x64xf32>
    %340 = vector.broadcast %321 : vector<1x64xf32> to vector<16x64xf32>
    %341 = arith.mulf %339, %340 : vector<16x64xf32>
    %342 = vector.broadcast %323 : vector<1x64xf32> to vector<16x64xf32>
    %343 = arith.addf %341, %342 : vector<16x64xf32>
    %344 = vector.extract_strided_slice %343 {offsets = [0, 0], sizes = [1, 64], strides = [1, 1]} : vector<16x64xf32> to vector<1x64xf32>
    %345 = vector.extract_strided_slice %343 {offsets = [8, 0], sizes = [1, 64], strides = [1, 1]} : vector<16x64xf32> to vector<1x64xf32>
    %346 = tpu.concatenate %344, %345 in 0 : vector<1x64xf32>, vector<1x64xf32> -> vector<2x64xf32>
    %c0_154 = arith.constant 0 : index
    %c0_155 = arith.constant 0 : index
    %347 = vector.load %arg16[%c0_154, %c0_155] : memref<64x64xbf16, #tpu.memory_space<vmem>>, vector<64x64xbf16>
    %c0_156 = arith.constant 0 : index
    %c0_157 = arith.constant 0 : index
    %348 = vector.load %arg17[%c0_156, %c0_157] : memref<1x64xf32, #tpu.memory_space<vmem>>, vector<1x64xf32>
    %349 = arith.truncf %346 : vector<2x64xf32> to vector<2x64xbf16>
    %cst_158 = arith.constant dense<0.000000e+00> : vector<2x64xf32>
    %350 = tpu.matmul %349, %347, %cst_158 {dimension_numbers = #tpu.dot_dimension_numbers<[1], [0], [0], [1], [0, 0, 1, 1], [], []>} : vector<2x64xbf16>, vector<64x64xbf16>, vector<2x64xf32> -> vector<2x64xf32>
    %351 = vector.broadcast %348 : vector<1x64xf32> to vector<2x64xf32>
    %352 = arith.addf %350, %351 : vector<2x64xf32>
    %353 = math.tanh %352 : vector<2x64xf32>
    %c0_159 = arith.constant 0 : index
    %c0_160 = arith.constant 0 : index
    %354 = vector.load %arg18[%c0_159, %c0_160] : memref<64x128xbf16, #tpu.memory_space<vmem>>, vector<64x128xbf16>
    %c0_161 = arith.constant 0 : index
    %c0_162 = arith.constant 0 : index
    %355 = vector.load %arg19[%c0_161, %c0_162] : memref<1x128xf32, #tpu.memory_space<vmem>>, vector<1x128xf32>
    %356 = arith.truncf %353 : vector<2x64xf32> to vector<2x64xbf16>
    %cst_163 = arith.constant dense<0.000000e+00> : vector<2x128xf32>
    %357 = tpu.matmul %356, %354, %cst_163 {dimension_numbers = #tpu.dot_dimension_numbers<[1], [0], [0], [1], [0, 0, 1, 1], [], []>} : vector<2x64xbf16>, vector<64x128xbf16>, vector<2x128xf32> -> vector<2x128xf32>
    %358 = vector.broadcast %355 : vector<1x128xf32> to vector<2x128xf32>
    %359 = arith.addf %357, %358 : vector<2x128xf32>
    %c0_164 = arith.constant 0 : index
    %c0_165 = arith.constant 0 : index
    %360 = vector.load %arg20[%c0_164, %c0_165] : memref<2x128xf32, #tpu.memory_space<vmem>>, vector<2x128xf32>
    tpu.vector_store %arg20[%c0_164, %c0_165], %359 {strides = array<i32>} : memref<2x128xf32, #tpu.memory_space<vmem>>, vector<2x128xf32>,
    return
  }
}

</mosaic_0001>

<llo_original>
// kernel: bert_classifier_forward.1
$region0: #{bert_classifier_forward.1}
  #allocation0 [shape = 'u32[]', space=smem, size = 0x4, offset = 0x4, fixed_abs, tag = 'smem constant byte address 0x4 - core index']
  #allocation1 [shape = 'u32[72,128]{1,0:T(1,128)}', space=vmem, size = 0x9000, scoped, tag = 'internal scratch']
  %s0 = inlined_call_operand.vmem [shape: f32[16,64], index: 0, kind: input, shape index: {}]
  %s1 = inlined_call_operand.vmem [shape: f32[64,8], index: 1, kind: input, shape index: {}]
  %s2 = inlined_call_operand.vmem [shape: f32[1,64], index: 2, kind: input, shape index: {}]
  %s3 = inlined_call_operand.vmem [shape: f32[1,64], index: 3, kind: input, shape index: {}]
  %s4 = inlined_call_operand.vmem [shape: bf16[2,64,192], index: 4, kind: input, shape index: {}]
  %s5 = inlined_call_operand.vmem [shape: f32[2,1,192], index: 5, kind: input, shape index: {}]
  %s6 = inlined_call_operand.vmem [shape: bf16[2,64,64], index: 6, kind: input, shape index: {}]
  %s7 = inlined_call_operand.vmem [shape: f32[2,1,64], index: 7, kind: input, shape index: {}]
  %s8 = inlined_call_operand.vmem [shape: f32[2,1,64], index: 8, kind: input, shape index: {}]
  %s9 = inlined_call_operand.vmem [shape: f32[2,1,64], index: 9, kind: input, shape index: {}]
  %s10 = inlined_call_operand.vmem [shape: bf16[2,64,128], index: 10, kind: input, shape index: {}]
  %s11 = inlined_call_operand.vmem [shape: f32[2,1,128], index: 11, kind: input, shape index: {}]
  %s12 = inlined_call_operand.vmem [shape: bf16[2,128,64], index: 12, kind: input, shape index: {}]
  %s13 = inlined_call_operand.vmem [shape: f32[2,1,64], index: 13, kind: input, shape index: {}]
  %s14 = inlined_call_operand.vmem [shape: f32[2,1,64], index: 14, kind: input, shape index: {}]
  %s15 = inlined_call_operand.vmem [shape: f32[2,1,64], index: 15, kind: input, shape index: {}]
  %s16 = inlined_call_operand.vmem [shape: bf16[64,64], index: 16, kind: input, shape index: {}]
  %s17 = inlined_call_operand.vmem [shape: f32[1,64], index: 17, kind: input, shape index: {}]
  %s18 = inlined_call_operand.vmem [shape: bf16[64,128], index: 18, kind: input, shape index: {}]
  %s19 = inlined_call_operand.vmem [shape: f32[1,128], index: 19, kind: input, shape index: {}]
  %s20 = inlined_call_operand.hbm [shape: f32[2,128], index: 20, kind: output, shape index: {}]
  %s21 = sld [smem:[#allocation0]]
  $region90: #{bert_classifier_forward.1} parent=0
    _
  %s23 = ssub.s32 1, %s21
  %s24 = scalar_select 0, %s23, %s21
  $region1: #{bert_classifier_forward.1} parent=0
    #allocation2 [shape = 'u8[1024]{0}', space=vmem, size = 0x400, scoped, tag = 'output window, operand 0, single buffered']
    #allocation3 [shape = 's32[1]{0}', space=sflag, size = 0x4, scoped, tag = 'scoped memory for bert_classifier_forward.1']
    %25 = vsyncpa [#allocation3], 0
    // Predicated region
    $region2: #{bert_classifier_forward.1} parent=1 // pred_check
      _
    $region3: #{bert_classifier_forward.1} parent=1 // pred_check_branch
      %27 = sbr.rel (0) target = $region5
    $region4: #{bert_classifier_forward.1} parent=1 // pred_region
      _
    $region5: #{bert_classifier_forward.1} parent=1 // pred_fallthru
      _
    // Predicated region
    $region6: #{bert_classifier_forward.1} parent=1 // pred_check
      _
    $region7: #{bert_classifier_forward.1} parent=1 // pred_check_branch
      %29 = sbr.rel (0) target = $region9
    $region8: #{bert_classifier_forward.1} parent=1 // pred_region
      _
    $region9: #{bert_classifier_forward.1} parent=1 // pred_fallthru
      _
    // Predicated region
    $region10: #{bert_classifier_forward.1} parent=1 // pred_check
      _
    $region11: #{bert_classifier_forward.1} parent=1 // pred_check_branch
      %31 = sbr.rel (0) target = $region13
    $region12: #{bert_classifier_forward.1} parent=1 // pred_region
      _
    $region13: #{bert_classifier_forward.1} parent=1 // pred_fallthru
      _
    // Predicated region
    $region14: #{bert_classifier_forward.1} parent=1 // pred_check
      _
    $region15: #{bert_classifier_forward.1} parent=1 // pred_check_branch
      %33 = sbr.rel (0) target = $region17
    $region16: #{bert_classifier_forward.1} parent=1 // pred_region
      _
    $region17: #{bert_classifier_forward.1} parent=1 // pred_fallthru
      _
    // Predicated region
    $region18: #{bert_classifier_forward.1} parent=1 // pred_check
      _
    $region19: #{bert_classifier_forward.1} parent=1 // pred_check_branch
      %35 = sbr.rel (0) target = $region21
    $region20: #{bert_classifier_forward.1} parent=1 // pred_region
      _
    $region21: #{bert_classifier_forward.1} parent=1 // pred_fallthru
      _
    // Predicated region
    $region22: #{bert_classifier_forward.1} parent=1 // pred_check
      _
    $region23: #{bert_classifier_forward.1} parent=1 // pred_check_branch
      %37 = sbr.rel (0) target = $region25
    $region24: #{bert_classifier_forward.1} parent=1 // pred_region
      _
    $region25: #{bert_classifier_forward.1} parent=1 // pred_fallthru
      _
    // Predicated region
    $region26: #{bert_classifier_forward.1} parent=1 // pred_check
      _
    $region27: #{bert_classifier_forward.1} parent=1 // pred_check_branch
      %39 = sbr.rel (0) target = $region29
    $region28: #{bert_classifier_forward.1} parent=1 // pred_region
      _
    $region29: #{bert_classifier_forward.1} parent=1 // pred_fallthru
      _
    // Predicated region
    $region30: #{bert_classifier_forward.1} parent=1 // pred_check
      _
    $region31: #{bert_classifier_forward.1} parent=1 // pred_check_branch
      %41 = sbr.rel (0) target = $region33
    $region32: #{bert_classifier_forward.1} parent=1 // pred_region
      _
    $region33: #{bert_classifier_forward.1} parent=1 // pred_fallthru
      _
    // Predicated region
    $region34: #{bert_classifier_forward.1} parent=1 // pred_check
      _
    $region35: #{bert_classifier_forward.1} parent=1 // pred_check_branch
      %43 = sbr.rel (0) target = $region37
    $region36: #{bert_classifier_forward.1} parent=1 // pred_region
      _
    $region37: #{bert_classifier_forward.1} parent=1 // pred_fallthru
      _
    // Predicated region
    $region38: #{bert_classifier_forward.1} parent=1 // pred_check
      _
    $region39: #{bert_classifier_forward.1} parent=1 // pred_check_branch
      %45 = sbr.rel (0) target = $region41
    $region40: #{bert_classifier_forward.1} parent=1 // pred_region
      _
    $region41: #{bert_classifier_forward.1} parent=1 // pred_fallthru
      _
    // Predicated region
    $region42: #{bert_classifier_forward.1} parent=1 // pred_check
      _
    $region43: #{bert_classifier_forward.1} parent=1 // pred_check_branch
      %47 = sbr.rel (0) target = $region45
    $region44: #{bert_classifier_forward.1} parent=1 // pred_region
      _
    $region45: #{bert_classifier_forward.1} parent=1 // pred_fallthru
      _
    // Predicated region
    $region46: #{bert_classifier_forward.1} parent=1 // pred_check
      _
    $region47: #{bert_classifier_forward.1} parent=1 // pred_check_branch
      %49 = sbr.rel (0) target = $region49
    $region48: #{bert_classifier_forward.1} parent=1 // pred_region
      _
    $region49: #{bert_classifier_forward.1} parent=1 // pred_fallthru
      _
    // Predicated region
    $region50: #{bert_classifier_forward.1} parent=1 // pred_check
      _
    $region51: #{bert_classifier_forward.1} parent=1 // pred_check_branch
      %51 = sbr.rel (0) target = $region53
    $region52: #{bert_classifier_forward.1} parent=1 // pred_region
      _
    $region53: #{bert_classifier_forward.1} parent=1 // pred_fallthru
      _
    // Predicated region
    $region54: #{bert_classifier_forward.1} parent=1 // pred_check
      _
    $region55: #{bert_classifier_forward.1} parent=1 // pred_check_branch
      %53 = sbr.rel (0) target = $region57
    $region56: #{bert_classifier_forward.1} parent=1 // pred_region
      _
    $region57: #{bert_classifier_forward.1} parent=1 // pred_fallthru
      _
    // Predicated region
    $region58: #{bert_classifier_forward.1} parent=1 // pred_check
      _
    $region59: #{bert_classifier_forward.1} parent=1 // pred_check_branch
      %55 = sbr.rel (0) target = $region61
    $region60: #{bert_classifier_forward.1} parent=1 // pred_region
      _
    $region61: #{bert_classifier_forward.1} parent=1 // pred_fallthru
      _
    // Predicated region
    $region62: #{bert_classifier_forward.1} parent=1 // pred_check
      _
    $region63: #{bert_classifier_forward.1} parent=1 // pred_check_branch
      %57 = sbr.rel (0) target = $region65
    $region64: #{bert_classifier_forward.1} parent=1 // pred_region
      _
    $region65: #{bert_classifier_forward.1} parent=1 // pred_fallthru
      _
    // Predicated region
    $region66: #{bert_classifier_forward.1} parent=1 // pred_check
      _
    $region67: #{bert_classifier_forward.1} parent=1 // pred_check_branch
      %59 = sbr.rel (0) target = $region69
    $region68: #{bert_classifier_forward.1} parent=1 // pred_region
      _
    $region69: #{bert_classifier_forward.1} parent=1 // pred_fallthru
      _
    // Predicated region
    $region70: #{bert_classifier_forward.1} parent=1 // pred_check
      _
    $region71: #{bert_classifier_forward.1} parent=1 // pred_check_branch
      %61 = sbr.rel (0) target = $region73
    $region72: #{bert_classifier_forward.1} parent=1 // pred_region
      _
    $region73: #{bert_classifier_forward.1} parent=1 // pred_fallthru
      _
    // Predicated region
    $region74: #{bert_classifier_forward.1} parent=1 // pred_check
      _
    $region75: #{bert_classifier_forward.1} parent=1 // pred_check_branch
      %63 = sbr.rel (0) target = $region77
    $region76: #{bert_classifier_forward.1} parent=1 // pred_region
      _
    $region77: #{bert_classifier_forward.1} parent=1 // pred_fallthru
      _
    // Predicated region
    $region78: #{bert_classifier_forward.1} parent=1 // pred_check
      _
    $region79: #{bert_classifier_forward.1} parent=1 // pred_check_branch
      %65 = sbr.rel (0) target = $region81
    $region80: #{bert_classifier_forward.1} parent=1 // pred_region
      _
    $region81: #{bert_classifier_forward.1} parent=1 // pred_fallthru
      _
    %v67 = vld [vmem:[%s0] sm:$0xff]
    %v68 = vld [vmem:[%s0 + $0x8] sm:$0xff]
    %v69 = vld [vmem:[%s2] sm:$0x1]
    %v70 = vld [vmem:[%s3] sm:$0x1]
    %vm71 = vcmask 523264
    %v72 = vsel %vm71, %v67, 0.0
    %73 = vadd.xlane.f32.xlu0 %v72
    %v74 = vpop.xlane.xlu0 %73
    %v75 = vsel %vm71, %v68, 0.0
    %76 = vadd.xlane.f32.xlu0 %v75
    %v77 = vpop.xlane.xlu0 %76
    %v78 = vrcp.pop 64.0
    %v79 = vmul.f32 64.0, %v78
    %v80 = vsub.f32 1.0, %v79
    %v81 = vmul.f32 %v78, %v80
    %v82 = vadd.f32 %v78, %v81
    %vm83 = vweird.f32 %v78
    %v84 = vsel %vm83, %v78, %v82
    %v85 = vmul.f32 %v74, %v84
    %v86 = vmul.f32 %v77, %v84
    %v87 = vsub.f32 %v67, %v85
    %v88 = vsub.f32 %v68, %v86
    %v89 = vmul.f32 %v87, %v87
    %v90 = vmul.f32 %v88, %v88
    %v91 = vsel %vm71, %v89, 0.0
    %92 = vadd.xlane.f32.xlu0 %v91
    %v93 = vpop.xlane.xlu0 %92
    %v94 = vsel %vm71, %v90, 0.0
    %95 = vadd.xlane.f32.xlu0 %v94
    %v96 = vpop.xlane.xlu0 %95
    %v97 = vmul.f32 %v93, %v84
    %v98 = vmul.f32 %v96, %v84
    %v99 = vadd.f32 %v97, 1e-12
    %v100 = vadd.f32 %v98, 1e-12
    %v101 = vrsqrt.pop %v99
    %v102 = vmul.f32 %v101, %v99
    %v103 = vmul.f32 %v102, %v101
    %v104 = vmul.f32 0.5, %v103
    %v105 = vsub.f32 1.5, %v104
    %v106 = vmul.f32 %v101, %v105
    %vm107 = vweird.f32 %v99
    %vm108 = vweird.f32 %v101
    %vm109 = vmor %vm107, %vm108
    %v110 = vsel %vm109, %v101, %v106
    %v111 = vrsqrt.pop %v100
    %v112 = vmul.f32 %v111, %v100
    %v113 = vmul.f32 %v112, %v111
    %v114 = vmul.f32 0.5, %v113
    %v115 = vsub.f32 1.5, %v114
    %v116 = vmul.f32 %v111, %v115
    %vm117 = vweird.f32 %v100
    %vm118 = vweird.f32 %v111
    %vm119 = vmor %vm117, %vm118
    %v120 = vsel %vm119, %v111, %v116
    %v121 = vmul.f32 %v87, %v110
    %v122 = vmul.f32 %v88, %v120
    %v124 = vperm.slane %v69, 0
    %v126 = vmul.f32 %v121, %v124
    %v127 = vmul.f32 %v122, %v124
    %v129 = vperm.slane %v70, 0
    %v131 = vadd.f32 %v126, %v129
    %v132 = vadd.f32 %v127, %v129
    %v133 = vld [vmem:[%s1] sm:$0xff]
    %v134 = vld [vmem:[%s1 + $0x8] sm:$0xff]
    %v135 = vld [vmem:[%s1 + $0x10] sm:$0xff]
    %v136 = vld [vmem:[%s1 + $0x18] sm:$0xff]
    %v137 = vld [vmem:[%s1 + $0x20] sm:$0xff]
    %v138 = vld [vmem:[%s1 + $0x28] sm:$0xff]
    %v139 = vld [vmem:[%s1 + $0x30] sm:$0xff]
    %v140 = vld [vmem:[%s1 + $0x38] sm:$0xff]
    %v141 = vld [vmem:[%s4] sm:$0xff]
    %v142 = vld [vmem:[%s4 + $0x8] sm:$0xff]
    %v143 = vld [vmem:[%s4 + $0x10] sm:$0xff]
    %v144 = vld [vmem:[%s4 + $0x18] sm:$0xff]
    %v145 = vld [vmem:[%s4 + $0x20] sm:$0xff]
    %v146 = vld [vmem:[%s4 + $0x28] sm:$0xff]
    %v147 = vld [vmem:[%s4 + $0x30] sm:$0xff]
    %v148 = vld [vmem:[%s4 + $0x38] sm:$0xff]
    %v149 = vld [vmem:[%s5] sm:$0x3]
    %v150 = vpack.c.bf16 %v132, %v131
    %v152 = vperm.slane %v149, 0
    %v153 = vperm.slane %v149, 1
    %v164 = vunpack.c.l.b16 %v141
    %v165 = vunpack.c.h.b16 %v141
    %v166 = vunpack.c.l.b16 %v142
    %v167 = vunpack.c.h.b16 %v142
    %v168 = vunpack.c.l.b16 %v143
    %v169 = vunpack.c.h.b16 %v143
    %v170 = vunpack.c.l.b16 %v144
    %v171 = vunpack.c.h.b16 %v144
    %v172 = vunpack.c.l.b16 %v145
    %v173 = vunpack.c.h.b16 %v145
    %v174 = vunpack.c.l.b16 %v146
    %v175 = vunpack.c.h.b16 %v146
    %v176 = vunpack.c.l.b16 %v147
    %v177 = vunpack.c.h.b16 %v147
    %v178 = vunpack.c.l.b16 %v148
    %v179 = vunpack.c.h.b16 %v148
    %v180 = vpack.c.b16 %v166, %v164
    %v181 = vpack.c.b16 %v167, %v165
    %v182 = vpack.c.b16 %v170, %v168
    %v183 = vpack.c.b16 %v171, %v169
    %v184 = vpack.c.b16 %v174, %v172
    %v185 = vpack.c.b16 %v175, %v173
    %v186 = vpack.c.b16 %v178, %v176
    %v187 = vpack.c.b16 %v179, %v177
    %v197 = vsel %vm71, %v150, 0
    %199 = vmatpush.bf16.msra.mxu0 0
    %200 = vmatpush.bf16.msra.mxu0 0
    %201 = vmatpush.bf16.msra.mxu0 0
    %202 = vmatpush.bf16.msra.mxu0 0
    %203 = vmatpush.bf16.msra.mxu0 %v186
    %204 = vmatpush.bf16.msra.mxu0 %v184
    %205 = vmatpush.bf16.msra.mxu0 %v182
    %206 = vmatpush.bf16.msra.mxu0 %v180
    %207 = vmatmul.bf16.gmra.mxu0 %v197
    %v208 = vpop.f32.mrf.mxu0
    %v209 = vadd.f32 %v152, %v208
    %v210 = vpop.f32.mrf.mxu0
    %v211 = vadd.f32 %v152, %v210
    %212 = vdwg.mxu0
    %213 = vmatpush.bf16.msra.mxu0 0
    %214 = vmatpush.bf16.msra.mxu0 0
    %215 = vmatpush.bf16.msra.mxu0 0
    %216 = vmatpush.bf16.msra.mxu0 0
    %217 = vmatpush.bf16.msra.mxu0 %v187
    %218 = vmatpush.bf16.msra.mxu0 %v185
    %219 = vmatpush.bf16.msra.mxu0 %v183
    %220 = vmatpush.bf16.msra.mxu0 %v181
    %221 = vmatmul.bf16.gmra.mxu0 %v197
    %v222 = vpop.f32.mrf.mxu0
    %v223 = vadd.f32 %v153, %v222
    %v224 = vpop.f32.mrf.mxu0
    %v225 = vadd.f32 %v153, %v224
    %226 = vdwg.mxu0
    %v227 = vpack.c.bf16 %v223, %v209
    %v228 = vpack.c.bf16 %v225, %v211
    %v230 = vunpack.c.l.b16 %v227
    %v231 = vpack.c.b16 %v230, %v230
    %232 = vrot.lane.b32.xlu0 %v231, 64
    %v233 = vpop.permute.xlu0 %232
    %vm234 = vcmask 130048
    %v236 = vsel %vm234, %v227, 0
    %v239 = vsel %vm234, %v233, 0
    %241 = vmatpush.bf16.xpose.msra.mxu0 0
    %242 = vmatpush.bf16.xpose.msra.mxu0 0
    %243 = vmatpush.bf16.xpose.msra.mxu0 0
    %244 = vmatpush.bf16.xpose.msra.mxu0 0
    %245 = vmatpush.bf16.xpose.msra.mxu0 0
    %246 = vmatpush.bf16.xpose.msra.mxu0 0
    %247 = vmatpush.bf16.xpose.msra.mxu0 0
    %248 = vmatpush.bf16.xpose.msra.mxu0 %v239
    %249 = vmatmul.bf16.gmra.mxu0 %v236
    %v250 = vpop.f32.mrf.mxu0
    %v251 = vadd.f32 0.0, %v250
    %v252 = vpop.f32.mrf.mxu0
    %253 = vdwg.mxu0
    %254 = vrot.lane.b32.xlu0 %v231, 112
    %v255 = vpop.permute.xlu0 %254
    %256 = vrot.lane.b32.xlu0 %v231, 48
    %v257 = vpop.permute.xlu0 %256
    %v259 = vsel %vm234, %v255, 0
    %v262 = vsel %vm234, %v257, 0
    %264 = vmatpush.bf16.xpose.msra.mxu0 0
    %265 = vmatpush.bf16.xpose.msra.mxu0 0
    %266 = vmatpush.bf16.xpose.msra.mxu0 0
    %267 = vmatpush.bf16.xpose.msra.mxu0 0
    %268 = vmatpush.bf16.xpose.msra.mxu0 0
    %269 = vmatpush.bf16.xpose.msra.mxu0 0
    %270 = vmatpush.bf16.xpose.msra.mxu0 0
    %271 = vmatpush.bf16.xpose.msra.mxu0 %v262
    %272 = vmatmul.bf16.gmra.mxu0 %v259
    %v273 = vpop.f32.mrf.mxu0
    %v274 = vadd.f32 0.0, %v273
    %v275 = vpop.f32.mrf.mxu0
    %276 = vdwg.mxu0
    %277 = vrot.lane.b32.xlu0 %v231, 96
    %v278 = vpop.permute.xlu0 %277
    %279 = vrot.lane.b32.xlu0 %v231, 32
    %v280 = vpop.permute.xlu0 %279
    %v282 = vsel %vm234, %v278, 0
    %v285 = vsel %vm234, %v280, 0
    %287 = vmatpush.bf16.xpose.msra.mxu0 0
    %288 = vmatpush.bf16.xpose.msra.mxu0 0
    %289 = vmatpush.bf16.xpose.msra.mxu0 0
    %290 = vmatpush.bf16.xpose.msra.mxu0 0
    %291 = vmatpush.bf16.xpose.msra.mxu0 0
    %292 = vmatpush.bf16.xpose.msra.mxu0 0
    %293 = vmatpush.bf16.xpose.msra.mxu0 0
    %294 = vmatpush.bf16.xpose.msra.mxu0 %v285
    %295 = vmatmul.bf16.gmra.mxu0 %v282
    %v296 = vpop.f32.mrf.mxu0
    %v297 = vadd.f32 0.0, %v296
    %v298 = vpop.f32.mrf.mxu0
    %299 = vdwg.mxu0
    %300 = vrot.lane.b32.xlu0 %v231, 80
    %v301 = vpop.permute.xlu0 %300
    %302 = vrot.lane.b32.xlu0 %v231, 16
    %v303 = vpop.permute.xlu0 %302
    %v305 = vsel %vm234, %v301, 0
    %v308 = vsel %vm234, %v303, 0
    %310 = vmatpush.bf16.xpose.msra.mxu0 0
    %311 = vmatpush.bf16.xpose.msra.mxu0 0
    %312 = vmatpush.bf16.xpose.msra.mxu0 0
    %313 = vmatpush.bf16.xpose.msra.mxu0 0
    %314 = vmatpush.bf16.xpose.msra.mxu0 0
    %315 = vmatpush.bf16.xpose.msra.mxu0 0
    %316 = vmatpush.bf16.xpose.msra.mxu0 0
    %317 = vmatpush.bf16.xpose.msra.mxu0 %v308
    %318 = vmatmul.bf16.gmra.mxu0 %v305
    %v319 = vpop.f32.mrf.mxu0
    %v320 = vadd.f32 0.0, %v319
    %v321 = vpop.f32.mrf.mxu0
    %322 = vdwg.mxu0
    %v324 = vunpack.c.l.b16 %v228
    %v325 = vpack.c.b16 %v324, %v324
    %326 = vrot.lane.b32.xlu0 %v325, 64
    %v327 = vpop.permute.xlu0 %326
    %v329 = vsel %vm234, %v228, 0
    %v332 = vsel %vm234, %v327, 0
    %334 = vmatpush.bf16.xpose.msra.mxu0 0
    %335 = vmatpush.bf16.xpose.msra.mxu0 0
    %336 = vmatpush.bf16.xpose.msra.mxu0 0
    %337 = vmatpush.bf16.xpose.msra.mxu0 0
    %338 = vmatpush.bf16.xpose.msra.mxu0 0
    %339 = vmatpush.bf16.xpose.msra.mxu0 0
    %340 = vmatpush.bf16.xpose.msra.mxu0 0
    %341 = vmatpush.bf16.xpose.msra.mxu0 %v332
    %342 = vmatmul.bf16.gmra.mxu0 %v329
    %v343 = vpop.f32.mrf.mxu0
    %v344 = vadd.f32 0.0, %v343
    %v345 = vpop.f32.mrf.mxu0
    %346 = vdwg.mxu0
    %347 = vrot.lane.b32.xlu0 %v325, 112
    %v348 = vpop.permute.xlu0 %347
    %349 = vrot.lane.b32.xlu0 %v325, 48
    %v350 = vpop.permute.xlu0 %349
    %v352 = vsel %vm234, %v348, 0
    %v355 = vsel %vm234, %v350, 0
    %357 = vmatpush.bf16.xpose.msra.mxu0 0
    %358 = vmatpush.bf16.xpose.msra.mxu0 0
    %359 = vmatpush.bf16.xpose.msra.mxu0 0
    %360 = vmatpush.bf16.xpose.msra.mxu0 0
    %361 = vmatpush.bf16.xpose.msra.mxu0 0
    %362 = vmatpush.bf16.xpose.msra.mxu0 0
    %363 = vmatpush.bf16.xpose.msra.mxu0 0
    %364 = vmatpush.bf16.xpose.msra.mxu0 %v355
    %365 = vmatmul.bf16.gmra.mxu0 %v352
    %v366 = vpop.f32.mrf.mxu0
    %v367 = vadd.f32 0.0, %v366
    %v368 = vpop.f32.mrf.mxu0
    %369 = vdwg.mxu0
    %370 = vrot.lane.b32.xlu0 %v325, 96
    %v371 = vpop.permute.xlu0 %370
    %372 = vrot.lane.b32.xlu0 %v325, 32
    %v373 = vpop.permute.xlu0 %372
    %v375 = vsel %vm234, %v371, 0
    %v378 = vsel %vm234, %v373, 0
    %380 = vmatpush.bf16.xpose.msra.mxu0 0
    %381 = vmatpush.bf16.xpose.msra.mxu0 0
    %382 = vmatpush.bf16.xpose.msra.mxu0 0
    %383 = vmatpush.bf16.xpose.msra.mxu0 0
    %384 = vmatpush.bf16.xpose.msra.mxu0 0
    %385 = vmatpush.bf16.xpose.msra.mxu0 0
    %386 = vmatpush.bf16.xpose.msra.mxu0 0
    %387 = vmatpush.bf16.xpose.msra.mxu0 %v378
    %388 = vmatmul.bf16.gmra.mxu0 %v375
    %v389 = vpop.f32.mrf.mxu0
    %v390 = vadd.f32 0.0, %v389
    %v391 = vpop.f32.mrf.mxu0
    %392 = vdwg.mxu0
    %393 = vrot.lane.b32.xlu0 %v325, 80
    %v394 = vpop.permute.xlu0 %393
    %395 = vrot.lane.b32.xlu0 %v325, 16
    %v396 = vpop.permute.xlu0 %395
    %v398 = vsel %vm234, %v394, 0
    %v401 = vsel %vm234, %v396, 0
    %403 = vmatpush.bf16.xpose.msra.mxu0 0
    %404 = vmatpush.bf16.xpose.msra.mxu0 0
    %405 = vmatpush.bf16.xpose.msra.mxu0 0
    %406 = vmatpush.bf16.xpose.msra.mxu0 0
    %407 = vmatpush.bf16.xpose.msra.mxu0 0
    %408 = vmatpush.bf16.xpose.msra.mxu0 0
    %409 = vmatpush.bf16.xpose.msra.mxu0 0
    %410 = vmatpush.bf16.xpose.msra.mxu0 %v401
    %411 = vmatmul.bf16.gmra.mxu0 %v398
    %v412 = vpop.f32.mrf.mxu0
    %v413 = vadd.f32 0.0, %v412
    %v414 = vpop.f32.mrf.mxu0
    %415 = vdwg.mxu0
    %v416 = vadd.f32 %v251, %v133
    %v417 = vadd.f32 %v274, %v134
    %v418 = vadd.f32 %v297, %v135
    %v419 = vadd.f32 %v320, %v136
    %v420 = vadd.f32 %v344, %v137
    %v421 = vadd.f32 %v367, %v138
    %v422 = vadd.f32 %v390, %v139
    %v423 = vadd.f32 %v413, %v140
    %vm424 = vcmask 64512
    %v425 = vsel %vm424, %v416, -inf
    %426 = vmax.xlane.f32.xlu0 %v425
    %v427 = vpop.xlane.xlu0 %426
    %v428 = vsel %vm424, %v417, -inf
    %429 = vmax.xlane.f32.xlu0 %v428
    %v430 = vpop.xlane.xlu0 %429
    %v431 = vsel %vm424, %v418, -inf
    %432 = vmax.xlane.f32.xlu0 %v431
    %v433 = vpop.xlane.xlu0 %432
    %v434 = vsel %vm424, %v419, -inf
    %435 = vmax.xlane.f32.xlu0 %v434
    %v436 = vpop.xlane.xlu0 %435
    %v437 = vsel %vm424, %v420, -inf
    %438 = vmax.xlane.f32.xlu0 %v437
    %v439 = vpop.xlane.xlu0 %438
    %v440 = vsel %vm424, %v421, -inf
    %441 = vmax.xlane.f32.xlu0 %v440
    %v442 = vpop.xlane.xlu0 %441
    %v443 = vsel %vm424, %v422, -inf
    %444 = vmax.xlane.f32.xlu0 %v443
    %v445 = vpop.xlane.xlu0 %444
    %v446 = vsel %vm424, %v423, -inf
    %447 = vmax.xlane.f32.xlu0 %v446
    %v448 = vpop.xlane.xlu0 %447
    %v449 = vsub.f32 %v416, %v427
    %v450 = vsub.f32 %v417, %v430
    %v451 = vsub.f32 %v418, %v433
    %v452 = vsub.f32 %v419, %v436
    %v453 = vsub.f32 %v420, %v439
    %v454 = vsub.f32 %v421, %v442
    %v455 = vsub.f32 %v422, %v445
    %v456 = vsub.f32 %v423, %v448
    %v457 = vmul.f32 %v449, 1.442695
    %v458 = vpow.pop %v457
    %v459 = vmul.f32 %v450, 1.442695
    %v460 = vpow.pop %v459
    %v461 = vmul.f32 %v451, 1.442695
    %v462 = vpow.pop %v461
    %v463 = vmul.f32 %v452, 1.442695
    %v464 = vpow.pop %v463
    %v465 = vmul.f32 %v453, 1.442695
    %v466 = vpow.pop %v465
    %v467 = vmul.f32 %v454, 1.442695
    %v468 = vpow.pop %v467
    %v469 = vmul.f32 %v455, 1.442695
    %v470 = vpow.pop %v469
    %v471 = vmul.f32 %v456, 1.442695
    %v472 = vpow.pop %v471
    %v473 = vsel %vm424, %v458, 0.0
    %474 = vadd.xlane.f32.xlu0 %v473
    %v475 = vpop.xlane.xlu0 %474
    %v476 = vsel %vm424, %v460, 0.0
    %477 = vadd.xlane.f32.xlu0 %v476
    %v478 = vpop.xlane.xlu0 %477
    %v479 = vsel %vm424, %v462, 0.0
    %480 = vadd.xlane.f32.xlu0 %v479
    %v481 = vpop.xlane.xlu0 %480
    %v482 = vsel %vm424, %v464, 0.0
    %483 = vadd.xlane.f32.xlu0 %v482
    %v484 = vpop.xlane.xlu0 %483
    %v485 = vsel %vm424, %v466, 0.0
    %486 = vadd.xlane.f32.xlu0 %v485
    %v487 = vpop.xlane.xlu0 %486
    %v488 = vsel %vm424, %v468, 0.0
    %489 = vadd.xlane.f32.xlu0 %v488
    %v490 = vpop.xlane.xlu0 %489
    %v491 = vsel %vm424, %v470, 0.0
    %492 = vadd.xlane.f32.xlu0 %v491
    %v493 = vpop.xlane.xlu0 %492
    %v494 = vsel %vm424, %v472, 0.0
    %495 = vadd.xlane.f32.xlu0 %v494
    %v496 = vpop.xlane.xlu0 %495
    %v497 = vrcp.pop %v475
    %v498 = vrcp.pop %v478
    %v499 = vrcp.pop %v481
    %v500 = vrcp.pop %v484
    %v501 = vrcp.pop %v487
    %v502 = vrcp.pop %v490
    %v503 = vrcp.pop %v493
    %v504 = vrcp.pop %v496
    %v505 = vmul.f32 %v458, %v497
    %v506 = vmul.f32 %v460, %v498
    %v507 = vmul.f32 %v462, %v499
    %v508 = vmul.f32 %v464, %v500
    %v509 = vmul.f32 %v466, %v501
    %v510 = vmul.f32 %v468, %v502
    %v511 = vmul.f32 %v470, %v503
    %v512 = vmul.f32 %v472, %v504
    %v513 = vpack.c.bf16 %v505, %v505
    %v514 = vpack.c.bf16 %v506, %v506
    %v515 = vpack.c.bf16 %v507, %v507
    %v516 = vpack.c.bf16 %v508, %v508
    %v517 = vpack.c.bf16 %v509, %v509
    %v518 = vpack.c.bf16 %v510, %v510
    %v519 = vpack.c.bf16 %v511, %v511
    %v520 = vpack.c.bf16 %v512, %v512
    %v521 = vunpack.c.h.b16 %v227
    %v522 = vpack.c.b16 %v521, %v521
    %v524 = vsel %vm424, %v513, 0
    %vm526 = vcmask 1043456
    %v528 = vsel %vm526, %v522, 0
    %530 = vmatpush.bf16.msra.mxu0 0
    %531 = vmatpush.bf16.msra.mxu0 0
    %532 = vmatpush.bf16.msra.mxu0 0
    %533 = vmatpush.bf16.msra.mxu0 0
    %534 = vmatpush.bf16.msra.mxu0 0
    %535 = vmatpush.bf16.msra.mxu0 0
    %536 = vmatpush.bf16.msra.mxu0 0
    %537 = vmatpush.bf16.msra.mxu0 %v528
    %538 = vmatmul.bf16.gmra.mxu0 %v524
    %v539 = vpop.f32.mrf.mxu0
    %v540 = vadd.f32 0.0, %v539
    %v541 = vpop.f32.mrf.mxu0
    %542 = vdwg.mxu0
    %543 = vrot.lane.b32.xlu0 %v522, 112
    %v544 = vpop.permute.xlu0 %543
    %v546 = vsel %vm424, %v514, 0
    %v549 = vsel %vm526, %v544, 0
    %551 = vmatpush.bf16.msra.mxu0 0
    %552 = vmatpush.bf16.msra.mxu0 0
    %553 = vmatpush.bf16.msra.mxu0 0
    %554 = vmatpush.bf16.msra.mxu0 0
    %555 = vmatpush.bf16.msra.mxu0 0
    %556 = vmatpush.bf16.msra.mxu0 0
    %557 = vmatpush.bf16.msra.mxu0 0
    %558 = vmatpush.bf16.msra.mxu0 %v549
    %559 = vmatmul.bf16.gmra.mxu0 %v546
    %v560 = vpop.f32.mrf.mxu0
    %v561 = vadd.f32 0.0, %v560
    %v562 = vpop.f32.mrf.mxu0
    %563 = vdwg.mxu0
    %564 = vrot.lane.b32.xlu0 %v522, 96
    %v565 = vpop.permute.xlu0 %564
    %v567 = vsel %vm424, %v515, 0
    %v570 = vsel %vm526, %v565, 0
    %572 = vmatpush.bf16.msra.mxu0 0
    %573 = vmatpush.bf16.msra.mxu0 0
    %574 = vmatpush.bf16.msra.mxu0 0
    %575 = vmatpush.bf16.msra.mxu0 0
    %576 = vmatpush.bf16.msra.mxu0 0
    %577 = vmatpush.bf16.msra.mxu0 0
    %578 = vmatpush.bf16.msra.mxu0 0
    %579 = vmatpush.bf16.msra.mxu0 %v570
    %580 = vmatmul.bf16.gmra.mxu0 %v567
    %v581 = vpop.f32.mrf.mxu0
    %v582 = vadd.f32 0.0, %v581
    %v583 = vpop.f32.mrf.mxu0
    %584 = vdwg.mxu0
    %585 = vrot.lane.b32.xlu0 %v522, 80
    %v586 = vpop.permute.xlu0 %585
    %v588 = vsel %vm424, %v516, 0
    %v591 = vsel %vm526, %v586, 0
    %593 = vmatpush.bf16.msra.mxu0 0
    %594 = vmatpush.bf16.msra.mxu0 0
    %595 = vmatpush.bf16.msra.mxu0 0
    %596 = vmatpush.bf16.msra.mxu0 0
    %597 = vmatpush.bf16.msra.mxu0 0
    %598 = vmatpush.bf16.msra.mxu0 0
    %599 = vmatpush.bf16.msra.mxu0 0
    %600 = vmatpush.bf16.msra.mxu0 %v591
    %601 = vmatmul.bf16.gmra.mxu0 %v588
    %v602 = vpop.f32.mrf.mxu0
    %v603 = vadd.f32 0.0, %v602
    %v604 = vpop.f32.mrf.mxu0
    %605 = vdwg.mxu0
    %607 = vrot.lane.b32.xlu0 %v561, 16
    %v608 = vpop.permute.xlu0 %607
    %611 = vrot.lane.b32.xlu0 %v582, 32
    %v612 = vpop.permute.xlu0 %611
    %615 = vrot.lane.b32.xlu0 %v603, 48
    %v616 = vpop.permute.xlu0 %615
    %v618 = vsel %vm234, %v540, %v608
    %vm619 = vcmask 261120
    %v620 = vsel %vm619, %v618, %v612
    %vm621 = vcmask 392192
    %v622 = vsel %vm621, %v620, %v616
    %v623 = vunpack.c.h.b16 %v228
    %v624 = vpack.c.b16 %v623, %v623
    %v626 = vsel %vm424, %v517, 0
    %v629 = vsel %vm526, %v624, 0
    %631 = vmatpush.bf16.msra.mxu0 0
    %632 = vmatpush.bf16.msra.mxu0 0
    %633 = vmatpush.bf16.msra.mxu0 0
    %634 = vmatpush.bf16.msra.mxu0 0
    %635 = vmatpush.bf16.msra.mxu0 0
    %636 = vmatpush.bf16.msra.mxu0 0
    %637 = vmatpush.bf16.msra.mxu0 0
    %638 = vmatpush.bf16.msra.mxu0 %v629
    %639 = vmatmul.bf16.gmra.mxu0 %v626
    %v640 = vpop.f32.mrf.mxu0
    %v641 = vadd.f32 0.0, %v640
    %v642 = vpop.f32.mrf.mxu0
    %643 = vdwg.mxu0
    %644 = vrot.lane.b32.xlu0 %v624, 112
    %v645 = vpop.permute.xlu0 %644
    %v647 = vsel %vm424, %v518, 0
    %v650 = vsel %vm526, %v645, 0
    %652 = vmatpush.bf16.msra.mxu0 0
    %653 = vmatpush.bf16.msra.mxu0 0
    %654 = vmatpush.bf16.msra.mxu0 0
    %655 = vmatpush.bf16.msra.mxu0 0
    %656 = vmatpush.bf16.msra.mxu0 0
    %657 = vmatpush.bf16.msra.mxu0 0
    %658 = vmatpush.bf16.msra.mxu0 0
    %659 = vmatpush.bf16.msra.mxu0 %v650
    %660 = vmatmul.bf16.gmra.mxu0 %v647
    %v661 = vpop.f32.mrf.mxu0
    %v662 = vadd.f32 0.0, %v661
    %v663 = vpop.f32.mrf.mxu0
    %664 = vdwg.mxu0
    %665 = vrot.lane.b32.xlu0 %v624, 96
    %v666 = vpop.permute.xlu0 %665
    %v668 = vsel %vm424, %v519, 0
    %v671 = vsel %vm526, %v666, 0
    %673 = vmatpush.bf16.msra.mxu0 0
    %674 = vmatpush.bf16.msra.mxu0 0
    %675 = vmatpush.bf16.msra.mxu0 0
    %676 = vmatpush.bf16.msra.mxu0 0
    %677 = vmatpush.bf16.msra.mxu0 0
    %678 = vmatpush.bf16.msra.mxu0 0
    %679 = vmatpush.bf16.msra.mxu0 0
    %680 = vmatpush.bf16.msra.mxu0 %v671
    %681 = vmatmul.bf16.gmra.mxu0 %v668
    %v682 = vpop.f32.mrf.mxu0
    %v683 = vadd.f32 0.0, %v682
    %v684 = vpop.f32.mrf.mxu0
    %685 = vdwg.mxu0
    %686 = vrot.lane.b32.xlu0 %v624, 80
    %v687 = vpop.permute.xlu0 %686
    %v689 = vsel %vm424, %v520, 0
    %v692 = vsel %vm526, %v687, 0
    %694 = vmatpush.bf16.msra.mxu0 0
    %695 = vmatpush.bf16.msra.mxu0 0
    %696 = vmatpush.bf16.msra.mxu0 0
    %697 = vmatpush.bf16.msra.mxu0 0
    %698 = vmatpush.bf16.msra.mxu0 0
    %699 = vmatpush.bf16.msra.mxu0 0
    %700 = vmatpush.bf16.msra.mxu0 0
    %701 = vmatpush.bf16.msra.mxu0 %v692
    %702 = vmatmul.bf16.gmra.mxu0 %v689
    %v703 = vpop.f32.mrf.mxu0
    %v704 = vadd.f32 0.0, %v703
    %v705 = vpop.f32.mrf.mxu0
    %706 = vdwg.mxu0
    %708 = vrot.lane.b32.xlu0 %v662, 16
    %v709 = vpop.permute.xlu0 %708
    %712 = vrot.lane.b32.xlu0 %v683, 32
    %v713 = vpop.permute.xlu0 %712
    %716 = vrot.lane.b32.xlu0 %v704, 48
    %v717 = vpop.permute.xlu0 %716
    %v719 = vsel %vm234, %v641, %v709
    %v720 = vsel %vm619, %v719, %v713
    %v721 = vsel %vm621, %v720, %v717
    %v722 = vld [vmem:[%s6] sm:$0xf]
    %v723 = vld [vmem:[%s6 + $0x4] sm:$0xf]
    %v724 = vld [vmem:[%s6 + $0x8] sm:$0xf]
    %v725 = vld [vmem:[%s6 + $0xc] sm:$0xf]
    %v726 = vld [vmem:[%s6 + $0x10] sm:$0xf]
    %v727 = vld [vmem:[%s6 + $0x14] sm:$0xf]
    %v728 = vld [vmem:[%s6 + $0x18] sm:$0xf]
    %v729 = vld [vmem:[%s6 + $0x1c] sm:$0xf]
    %v730 = vld [vmem:[%s7] sm:$0x1]
    %v731 = vpack.c.bf16 %v721, %v622
    %v733 = vperm.slane %v730, 0
    %v743 = vunpack.c.l.b16 %v722
    %v744 = vunpack.c.l.b16 %v723
    %v745 = vunpack.c.l.b16 %v724
    %v746 = vunpack.c.l.b16 %v725
    %v747 = vunpack.c.l.b16 %v726
    %v748 = vunpack.c.l.b16 %v727
    %v749 = vunpack.c.l.b16 %v728
    %v750 = vunpack.c.l.b16 %v729
    %v751 = vpack.c.b16 %v744, %v743
    %v752 = vpack.c.b16 %v746, %v745
    %v753 = vpack.c.b16 %v748, %v747
    %v754 = vpack.c.b16 %v750, %v749
    %v760 = vsel %vm71, %v731, 0
    %762 = vmatpush.bf16.msra.mxu0 0
    %763 = vmatpush.bf16.msra.mxu0 0
    %764 = vmatpush.bf16.msra.mxu0 0
    %765 = vmatpush.bf16.msra.mxu0 0
    %766 = vmatpush.bf16.msra.mxu0 %v754
    %767 = vmatpush.bf16.msra.mxu0 %v753
    %768 = vmatpush.bf16.msra.mxu0 %v752
    %769 = vmatpush.bf16.msra.mxu0 %v751
    %770 = vmatmul.bf16.gmra.mxu0 %v760
    %v771 = vpop.f32.mrf.mxu0
    %v772 = vadd.f32 %v733, %v771
    %v773 = vpop.f32.mrf.mxu0
    %v774 = vadd.f32 %v733, %v773
    %775 = vdwg.mxu0
    %v776 = vadd.f32 %v772, %v131
    %v777 = vadd.f32 %v774, %v132
    %v778 = vld [vmem:[%s8] sm:$0x1]
    %v779 = vld [vmem:[%s9] sm:$0x1]
    %v780 = vsel %vm71, %v776, 0.0
    %781 = vadd.xlane.f32.xlu0 %v780
    %v782 = vpop.xlane.xlu0 %781
    %v783 = vsel %vm71, %v777, 0.0
    %784 = vadd.xlane.f32.xlu0 %v783
    %v785 = vpop.xlane.xlu0 %784
    %v786 = vmul.f32 %v782, %v84
    %v787 = vmul.f32 %v785, %v84
    %v788 = vsub.f32 %v776, %v786
    %v789 = vsub.f32 %v777, %v787
    %v790 = vmul.f32 %v788, %v788
    %v791 = vmul.f32 %v789, %v789
    %v792 = vsel %vm71, %v790, 0.0
    %793 = vadd.xlane.f32.xlu0 %v792
    %v794 = vpop.xlane.xlu0 %793
    %v795 = vsel %vm71, %v791, 0.0
    %796 = vadd.xlane.f32.xlu0 %v795
    %v797 = vpop.xlane.xlu0 %796
    %v798 = vmul.f32 %v794, %v84
    %v799 = vmul.f32 %v797, %v84
    %v800 = vadd.f32 %v798, 1e-12
    %v801 = vadd.f32 %v799, 1e-12
    %v802 = vrsqrt.pop %v800
    %v803 = vmul.f32 %v802, %v800
    %v804 = vmul.f32 %v803, %v802
    %v805 = vmul.f32 0.5, %v804
    %v806 = vsub.f32 1.5, %v805
    %v807 = vmul.f32 %v802, %v806
    %vm808 = vweird.f32 %v800
    %vm809 = vweird.f32 %v802
    %vm810 = vmor %vm808, %vm809
    %v811 = vsel %vm810, %v802, %v807
    %v812 = vrsqrt.pop %v801
    %v813 = vmul.f32 %v812, %v801
    %v814 = vmul.f32 %v813, %v812
    %v815 = vmul.f32 0.5, %v814
    %v816 = vsub.f32 1.5, %v815
    %v817 = vmul.f32 %v812, %v816
    %vm818 = vweird.f32 %v801
    %vm819 = vweird.f32 %v812
    %vm820 = vmor %vm818, %vm819
    %v821 = vsel %vm820, %v812, %v817
    %v822 = vmul.f32 %v788, %v811
    %v823 = vmul.f32 %v789, %v821
    %v825 = vperm.slane %v778, 0
    %v827 = vmul.f32 %v822, %v825
    %v828 = vmul.f32 %v823, %v825
    %v830 = vperm.slane %v779, 0
    %v832 = vadd.f32 %v827, %v830
    %v833 = vadd.f32 %v828, %v830
    %v834 = vld [vmem:[%s10] sm:$0xf]
    %v835 = vld [vmem:[%s10 + $0x4] sm:$0xf]
    %v836 = vld [vmem:[%s10 + $0x8] sm:$0xf]
    %v837 = vld [vmem:[%s10 + $0xc] sm:$0xf]
    %v838 = vld [vmem:[%s10 + $0x10] sm:$0xf]
    %v839 = vld [vmem:[%s10 + $0x14] sm:$0xf]
    %v840 = vld [vmem:[%s10 + $0x18] sm:$0xf]
    %v841 = vld [vmem:[%s10 + $0x1c] sm:$0xf]
    %v842 = vld [vmem:[%s11] sm:$0x1]
    %v843 = vpack.c.bf16 %v833, %v832
    %v845 = vperm.slane %v842, 0
    %v855 = vunpack.c.l.b16 %v834
    %v856 = vunpack.c.l.b16 %v835
    %v857 = vunpack.c.l.b16 %v836
    %v858 = vunpack.c.l.b16 %v837
    %v859 = vunpack.c.l.b16 %v838
    %v860 = vunpack.c.l.b16 %v839
    %v861 = vunpack.c.l.b16 %v840
    %v862 = vunpack.c.l.b16 %v841
    %v863 = vpack.c.b16 %v856, %v855
    %v864 = vpack.c.b16 %v858, %v857
    %v865 = vpack.c.b16 %v860, %v859
    %v866 = vpack.c.b16 %v862, %v861
    %v872 = vsel %vm71, %v843, 0
    %874 = vmatpush.bf16.msra.mxu0 0
    %875 = vmatpush.bf16.msra.mxu0 0
    %876 = vmatpush.bf16.msra.mxu0 0
    %877 = vmatpush.bf16.msra.mxu0 0
    %878 = vmatpush.bf16.msra.mxu0 %v866
    %879 = vmatpush.bf16.msra.mxu0 %v865
    %880 = vmatpush.bf16.msra.mxu0 %v864
    %881 = vmatpush.bf16.msra.mxu0 %v863
    %882 = vmatmul.bf16.gmra.mxu0 %v872
    %v883 = vpop.f32.mrf.mxu0
    %v884 = vadd.f32 %v845, %v883
    %v885 = vpop.f32.mrf.mxu0
    %v886 = vadd.f32 %v845, %v885
    %887 = vdwg.mxu0
    %v888 = vmul.f32 %v884, 0.5
    %v889 = vmul.f32 %v886, 0.5
    %v890 = vmul.f32 %v884, %v884
    %v891 = vmul.f32 %v886, %v886
    %v892 = vmul.f32 %v890, %v884
    %v893 = vmul.f32 %v891, %v886
    %v894 = vmul.f32 %v892, 0.044715
    %v895 = vmul.f32 %v893, 0.044715
    %v896 = vadd.f32 %v884, %v894
    %v897 = vadd.f32 %v886, %v895
    %v898 = vmul.f32 %v896, 0.7978846
    %v899 = vmul.f32 %v897, 0.7978846
    %v900 = vtanh.pop %v898
    %v901 = vtanh.pop %v899
    %v902 = vadd.f32 %v900, 1.0
    %v903 = vadd.f32 %v901, 1.0
    %v904 = vmul.f32 %v888, %v902
    %v905 = vmul.f32 %v889, %v903
    %v906 = vld [vmem:[%s12] sm:$0xf]
    %v907 = vld [vmem:[%s12 + $0x4] sm:$0xf]
    %v908 = vld [vmem:[%s12 + $0x8] sm:$0xf]
    %v909 = vld [vmem:[%s12 + $0xc] sm:$0xf]
    %v910 = vld [vmem:[%s12 + $0x10] sm:$0xf]
    %v911 = vld [vmem:[%s12 + $0x14] sm:$0xf]
    %v912 = vld [vmem:[%s12 + $0x18] sm:$0xf]
    %v913 = vld [vmem:[%s12 + $0x1c] sm:$0xf]
    %v914 = vld [vmem:[%s12 + $0x20] sm:$0xf]
    %v915 = vld [vmem:[%s12 + $0x24] sm:$0xf]
    %v916 = vld [vmem:[%s12 + $0x28] sm:$0xf]
    %v917 = vld [vmem:[%s12 + $0x2c] sm:$0xf]
    %v918 = vld [vmem:[%s12 + $0x30] sm:$0xf]
    %v919 = vld [vmem:[%s12 + $0x34] sm:$0xf]
    %v920 = vld [vmem:[%s12 + $0x38] sm:$0xf]
    %v921 = vld [vmem:[%s12 + $0x3c] sm:$0xf]
    %v922 = vld [vmem:[%s13] sm:$0x1]
    %v923 = vpack.c.bf16 %v905, %v904
    %v925 = vperm.slane %v922, 0
    %v943 = vunpack.c.l.b16 %v906
    %v944 = vunpack.c.l.b16 %v907
    %v945 = vunpack.c.l.b16 %v908
    %v946 = vunpack.c.l.b16 %v909
    %v947 = vunpack.c.l.b16 %v910
    %v948 = vunpack.c.l.b16 %v911
    %v949 = vunpack.c.l.b16 %v912
    %v950 = vunpack.c.l.b16 %v913
    %v951 = vunpack.c.l.b16 %v914
    %v952 = vunpack.c.l.b16 %v915
    %v953 = vunpack.c.l.b16 %v916
    %v954 = vunpack.c.l.b16 %v917
    %v955 = vunpack.c.l.b16 %v918
    %v956 = vunpack.c.l.b16 %v919
    %v957 = vunpack.c.l.b16 %v920
    %v958 = vunpack.c.l.b16 %v921
    %v959 = vpack.c.b16 %v944, %v943
    %v960 = vpack.c.b16 %v946, %v945
    %v961 = vpack.c.b16 %v948, %v947
    %v962 = vpack.c.b16 %v950, %v949
    %v963 = vpack.c.b16 %v952, %v951
    %v964 = vpack.c.b16 %v954, %v953
    %v965 = vpack.c.b16 %v956, %v955
    %v966 = vpack.c.b16 %v958, %v957
    %975 = vmatpush.bf16.msra.mxu0 %v966
    %976 = vmatpush.bf16.msra.mxu0 %v965
    %977 = vmatpush.bf16.msra.mxu0 %v964
    %978 = vmatpush.bf16.msra.mxu0 %v963
    %979 = vmatpush.bf16.msra.mxu0 %v962
    %980 = vmatpush.bf16.msra.mxu0 %v961
    %981 = vmatpush.bf16.msra.mxu0 %v960
    %982 = vmatpush.bf16.msra.mxu0 %v959
    %983 = vmatmul.bf16.gmra.mxu0 %v923
    %v984 = vpop.f32.mrf.mxu0
    %v985 = vadd.f32 %v925, %v984
    %v986 = vpop.f32.mrf.mxu0
    %v987 = vadd.f32 %v925, %v986
    %988 = vdwg.mxu0
    %v989 = vadd.f32 %v985, %v832
    %v990 = vadd.f32 %v987, %v833
    %v991 = vld [vmem:[%s14] sm:$0x1]
    %v992 = vld [vmem:[%s15] sm:$0x1]
    %v993 = vsel %vm71, %v989, 0.0
    %994 = vadd.xlane.f32.xlu0 %v993
    %v995 = vpop.xlane.xlu0 %994
    %v996 = vsel %vm71, %v990, 0.0
    %997 = vadd.xlane.f32.xlu0 %v996
    %v998 = vpop.xlane.xlu0 %997
    %v999 = vmul.f32 %v995, %v84
    %v1000 = vmul.f32 %v998, %v84
    %v1001 = vsub.f32 %v989, %v999
    %v1002 = vsub.f32 %v990, %v1000
    %v1003 = vmul.f32 %v1001, %v1001
    %v1004 = vmul.f32 %v1002, %v1002
    %v1005 = vsel %vm71, %v1003, 0.0
    %1006 = vadd.xlane.f32.xlu0 %v1005
    %v1007 = vpop.xlane.xlu0 %1006
    %v1008 = vsel %vm71, %v1004, 0.0
    %1009 = vadd.xlane.f32.xlu0 %v1008
    %v1010 = vpop.xlane.xlu0 %1009
    %v1011 = vmul.f32 %v1007, %v84
    %v1012 = vmul.f32 %v1010, %v84
    %v1013 = vadd.f32 %v1011, 1e-12
    %v1014 = vadd.f32 %v1012, 1e-12
    %v1015 = vrsqrt.pop %v1013
    %v1016 = vmul.f32 %v1015, %v1013
    %v1017 = vmul.f32 %v1016, %v1015
    %v1018 = vmul.f32 0.5, %v1017
    %v1019 = vsub.f32 1.5, %v1018
    %v1020 = vmul.f32 %v1015, %v1019
    %vm1021 = vweird.f32 %v1013
    %vm1022 = vweird.f32 %v1015
    %vm1023 = vmor %vm1021, %vm1022
    %v1024 = vsel %vm1023, %v1015, %v1020
    %v1025 = vrsqrt.pop %v1014
    %v1026 = vmul.f32 %v1025, %v1014
    %v1027 = vmul.f32 %v1026, %v1025
    %v1028 = vmul.f32 0.5, %v1027
    %v1029 = vsub.f32 1.5, %v1028
    %v1030 = vmul.f32 %v1025, %v1029
    %vm1031 = vweird.f32 %v1014
    %vm1032 = vweird.f32 %v1025
    %vm1033 = vmor %vm1031, %vm1032
    %v1034 = vsel %vm1033, %v1025, %v1030
    %v1035 = vmul.f32 %v1001, %v1024
    %v1036 = vmul.f32 %v1002, %v1034
    %v1038 = vperm.slane %v991, 0
    %v1040 = vmul.f32 %v1035, %v1038
    %v1041 = vmul.f32 %v1036, %v1038
    %v1043 = vperm.slane %v992, 0
    %v1045 = vadd.f32 %v1040, %v1043
    %v1046 = vadd.f32 %v1041, %v1043
    %s1047 = scalar_lea.vmem %s4, 64
    %v1048 = vld [vmem:[%s1047] sm:$0xff]
    %v1049 = vld [vmem:[%s1047 + $0x8] sm:$0xff]
    %v1050 = vld [vmem:[%s1047 + $0x10] sm:$0xff]
    %v1051 = vld [vmem:[%s1047 + $0x18] sm:$0xff]
    %v1052 = vld [vmem:[%s1047 + $0x20] sm:$0xff]
    %v1053 = vld [vmem:[%s1047 + $0x28] sm:$0xff]
    %v1054 = vld [vmem:[%s1047 + $0x30] sm:$0xff]
    %v1055 = vld [vmem:[%s1047 + $0x38] sm:$0xff]
    %s1056 = scalar_lea.vmem %s5, 2
    %v1057 = vld [vmem:[%s1056] sm:$0x3]
    %v1058 = vpack.c.bf16 %v1046, %v1045
    %v1060 = vperm.slane %v1057, 0
    %v1061 = vperm.slane %v1057, 1
    %v1072 = vunpack.c.l.b16 %v1048
    %v1073 = vunpack.c.h.b16 %v1048
    %v1074 = vunpack.c.l.b16 %v1049
    %v1075 = vunpack.c.h.b16 %v1049
    %v1076 = vunpack.c.l.b16 %v1050
    %v1077 = vunpack.c.h.b16 %v1050
    %v1078 = vunpack.c.l.b16 %v1051
    %v1079 = vunpack.c.h.b16 %v1051
    %v1080 = vunpack.c.l.b16 %v1052
    %v1081 = vunpack.c.h.b16 %v1052
    %v1082 = vunpack.c.l.b16 %v1053
    %v1083 = vunpack.c.h.b16 %v1053
    %v1084 = vunpack.c.l.b16 %v1054
    %v1085 = vunpack.c.h.b16 %v1054
    %v1086 = vunpack.c.l.b16 %v1055
    %v1087 = vunpack.c.h.b16 %v1055
    %v1088 = vpack.c.b16 %v1074, %v1072
    %v1089 = vpack.c.b16 %v1075, %v1073
    %v1090 = vpack.c.b16 %v1078, %v1076
    %v1091 = vpack.c.b16 %v1079, %v1077
    %v1092 = vpack.c.b16 %v1082, %v1080
    %v1093 = vpack.c.b16 %v1083, %v1081
    %v1094 = vpack.c.b16 %v1086, %v1084
    %v1095 = vpack.c.b16 %v1087, %v1085
    %v1105 = vsel %vm71, %v1058, 0
    %1107 = vmatpush.bf16.msra.mxu0 0
    %1108 = vmatpush.bf16.msra.mxu0 0
    %1109 = vmatpush.bf16.msra.mxu0 0
    %1110 = vmatpush.bf16.msra.mxu0 0
    %1111 = vmatpush.bf16.msra.mxu0 %v1094
    %1112 = vmatpush.bf16.msra.mxu0 %v1092
    %1113 = vmatpush.bf16.msra.mxu0 %v1090
    %1114 = vmatpush.bf16.msra.mxu0 %v1088
    %1115 = vmatmul.bf16.gmra.mxu0 %v1105
    %v1116 = vpop.f32.mrf.mxu0
    %v1117 = vadd.f32 %v1060, %v1116
    %v1118 = vpop.f32.mrf.mxu0
    %v1119 = vadd.f32 %v1060, %v1118
    %1120 = vdwg.mxu0
    %1121 = vmatpush.bf16.msra.mxu0 0
    %1122 = vmatpush.bf16.msra.mxu0 0
    %1123 = vmatpush.bf16.msra.mxu0 0
    %1124 = vmatpush.bf16.msra.mxu0 0
    %1125 = vmatpush.bf16.msra.mxu0 %v1095
    %1126 = vmatpush.bf16.msra.mxu0 %v1093
    %1127 = vmatpush.bf16.msra.mxu0 %v1091
    %1128 = vmatpush.bf16.msra.mxu0 %v1089
    %1129 = vmatmul.bf16.gmra.mxu0 %v1105
    %v1130 = vpop.f32.mrf.mxu0
    %v1131 = vadd.f32 %v1061, %v1130
    %v1132 = vpop.f32.mrf.mxu0
    %v1133 = vadd.f32 %v1061, %v1132
    %1134 = vdwg.mxu0
    %v1135 = vpack.c.bf16 %v1131, %v1117
    %v1136 = vpack.c.bf16 %v1133, %v1119
    %v1138 = vunpack.c.l.b16 %v1135
    %v1139 = vpack.c.b16 %v1138, %v1138
    %1140 = vrot.lane.b32.xlu0 %v1139, 64
    %v1141 = vpop.permute.xlu0 %1140
    %v1143 = vsel %vm234, %v1135, 0
    %v1146 = vsel %vm234, %v1141, 0
    %1148 = vmatpush.bf16.xpose.msra.mxu0 0
    %1149 = vmatpush.bf16.xpose.msra.mxu0 0
    %1150 = vmatpush.bf16.xpose.msra.mxu0 0
    %1151 = vmatpush.bf16.xpose.msra.mxu0 0
    %1152 = vmatpush.bf16.xpose.msra.mxu0 0
    %1153 = vmatpush.bf16.xpose.msra.mxu0 0
    %1154 = vmatpush.bf16.xpose.msra.mxu0 0
    %1155 = vmatpush.bf16.xpose.msra.mxu0 %v1146
    %1156 = vmatmul.bf16.gmra.mxu0 %v1143
    %v1157 = vpop.f32.mrf.mxu0
    %v1158 = vadd.f32 0.0, %v1157
    %v1159 = vpop.f32.mrf.mxu0
    %1160 = vdwg.mxu0
    %1161 = vrot.lane.b32.xlu0 %v1139, 112
    %v1162 = vpop.permute.xlu0 %1161
    %1163 = vrot.lane.b32.xlu0 %v1139, 48
    %v1164 = vpop.permute.xlu0 %1163
    %v1166 = vsel %vm234, %v1162, 0
    %v1169 = vsel %vm234, %v1164, 0
    %1171 = vmatpush.bf16.xpose.msra.mxu0 0
    %1172 = vmatpush.bf16.xpose.msra.mxu0 0
    %1173 = vmatpush.bf16.xpose.msra.mxu0 0
    %1174 = vmatpush.bf16.xpose.msra.mxu0 0
    %1175 = vmatpush.bf16.xpose.msra.mxu0 0
    %1176 = vmatpush.bf16.xpose.msra.mxu0 0
    %1177 = vmatpush.bf16.xpose.msra.mxu0 0
    %1178 = vmatpush.bf16.xpose.msra.mxu0 %v1169
    %1179 = vmatmul.bf16.gmra.mxu0 %v1166
    %v1180 = vpop.f32.mrf.mxu0
    %v1181 = vadd.f32 0.0, %v1180
    %v1182 = vpop.f32.mrf.mxu0
    %1183 = vdwg.mxu0
    %1184 = vrot.lane.b32.xlu0 %v1139, 96
    %v1185 = vpop.permute.xlu0 %1184
    %1186 = vrot.lane.b32.xlu0 %v1139, 32
    %v1187 = vpop.permute.xlu0 %1186
    %v1189 = vsel %vm234, %v1185, 0
    %v1192 = vsel %vm234, %v1187, 0
    %1194 = vmatpush.bf16.xpose.msra.mxu0 0
    %1195 = vmatpush.bf16.xpose.msra.mxu0 0
    %1196 = vmatpush.bf16.xpose.msra.mxu0 0
    %1197 = vmatpush.bf16.xpose.msra.mxu0 0
    %1198 = vmatpush.bf16.xpose.msra.mxu0 0
    %1199 = vmatpush.bf16.xpose.msra.mxu0 0
    %1200 = vmatpush.bf16.xpose.msra.mxu0 0
    %1201 = vmatpush.bf16.xpose.msra.mxu0 %v1192
    %1202 = vmatmul.bf16.gmra.mxu0 %v1189
    %v1203 = vpop.f32.mrf.mxu0
    %v1204 = vadd.f32 0.0, %v1203
    %v1205 = vpop.f32.mrf.mxu0
    %1206 = vdwg.mxu0
    %1207 = vrot.lane.b32.xlu0 %v1139, 80
    %v1208 = vpop.permute.xlu0 %1207
    %1209 = vrot.lane.b32.xlu0 %v1139, 16
    %v1210 = vpop.permute.xlu0 %1209
    %v1212 = vsel %vm234, %v1208, 0
    %v1215 = vsel %vm234, %v1210, 0
    %1217 = vmatpush.bf16.xpose.msra.mxu0 0
    %1218 = vmatpush.bf16.xpose.msra.mxu0 0
    %1219 = vmatpush.bf16.xpose.msra.mxu0 0
    %1220 = vmatpush.bf16.xpose.msra.mxu0 0
    %1221 = vmatpush.bf16.xpose.msra.mxu0 0
    %1222 = vmatpush.bf16.xpose.msra.mxu0 0
    %1223 = vmatpush.bf16.xpose.msra.mxu0 0
    %1224 = vmatpush.bf16.xpose.msra.mxu0 %v1215
    %1225 = vmatmul.bf16.gmra.mxu0 %v1212
    %v1226 = vpop.f32.mrf.mxu0
    %v1227 = vadd.f32 0.0, %v1226
    %v1228 = vpop.f32.mrf.mxu0
    %1229 = vdwg.mxu0
    %v1231 = vunpack.c.l.b16 %v1136
    %v1232 = vpack.c.b16 %v1231, %v1231
    %1233 = vrot.lane.b32.xlu0 %v1232, 64
    %v1234 = vpop.permute.xlu0 %1233
    %v1236 = vsel %vm234, %v1136, 0
    %v1239 = vsel %vm234, %v1234, 0
    %1241 = vmatpush.bf16.xpose.msra.mxu0 0
    %1242 = vmatpush.bf16.xpose.msra.mxu0 0
    %1243 = vmatpush.bf16.xpose.msra.mxu0 0
    %1244 = vmatpush.bf16.xpose.msra.mxu0 0
    %1245 = vmatpush.bf16.xpose.msra.mxu0 0
    %1246 = vmatpush.bf16.xpose.msra.mxu0 0
    %1247 = vmatpush.bf16.xpose.msra.mxu0 0
    %1248 = vmatpush.bf16.xpose.msra.mxu0 %v1239
    %1249 = vmatmul.bf16.gmra.mxu0 %v1236
    %v1250 = vpop.f32.mrf.mxu0
    %v1251 = vadd.f32 0.0, %v1250
    %v1252 = vpop.f32.mrf.mxu0
    %1253 = vdwg.mxu0
    %1254 = vrot.lane.b32.xlu0 %v1232, 112
    %v1255 = vpop.permute.xlu0 %1254
    %1256 = vrot.lane.b32.xlu0 %v1232, 48
    %v1257 = vpop.permute.xlu0 %1256
    %v1259 = vsel %vm234, %v1255, 0
    %v1262 = vsel %vm234, %v1257, 0
    %1264 = vmatpush.bf16.xpose.msra.mxu0 0
    %1265 = vmatpush.bf16.xpose.msra.mxu0 0
    %1266 = vmatpush.bf16.xpose.msra.mxu0 0
    %1267 = vmatpush.bf16.xpose.msra.mxu0 0
    %1268 = vmatpush.bf16.xpose.msra.mxu0 0
    %1269 = vmatpush.bf16.xpose.msra.mxu0 0
    %1270 = vmatpush.bf16.xpose.msra.mxu0 0
    %1271 = vmatpush.bf16.xpose.msra.mxu0 %v1262
    %1272 = vmatmul.bf16.gmra.mxu0 %v1259
    %v1273 = vpop.f32.mrf.mxu0
    %v1274 = vadd.f32 0.0, %v1273
    %v1275 = vpop.f32.mrf.mxu0
    %1276 = vdwg.mxu0
    %1277 = vrot.lane.b32.xlu0 %v1232, 96
    %v1278 = vpop.permute.xlu0 %1277
    %1279 = vrot.lane.b32.xlu0 %v1232, 32
    %v1280 = vpop.permute.xlu0 %1279
    %v1282 = vsel %vm234, %v1278, 0
    %v1285 = vsel %vm234, %v1280, 0
    %1287 = vmatpush.bf16.xpose.msra.mxu0 0
    %1288 = vmatpush.bf16.xpose.msra.mxu0 0
    %1289 = vmatpush.bf16.xpose.msra.mxu0 0
    %1290 = vmatpush.bf16.xpose.msra.mxu0 0
    %1291 = vmatpush.bf16.xpose.msra.mxu0 0
    %1292 = vmatpush.bf16.xpose.msra.mxu0 0
    %1293 = vmatpush.bf16.xpose.msra.mxu0 0
    %1294 = vmatpush.bf16.xpose.msra.mxu0 %v1285
    %1295 = vmatmul.bf16.gmra.mxu0 %v1282
    %v1296 = vpop.f32.mrf.mxu0
    %v1297 = vadd.f32 0.0, %v1296
    %v1298 = vpop.f32.mrf.mxu0
    %1299 = vdwg.mxu0
    %1300 = vrot.lane.b32.xlu0 %v1232, 80
    %v1301 = vpop.permute.xlu0 %1300
    %1302 = vrot.lane.b32.xlu0 %v1232, 16
    %v1303 = vpop.permute.xlu0 %1302
    %v1305 = vsel %vm234, %v1301, 0
    %v1308 = vsel %vm234, %v1303, 0
    %1310 = vmatpush.bf16.xpose.msra.mxu0 0
    %1311 = vmatpush.bf16.xpose.msra.mxu0 0
    %1312 = vmatpush.bf16.xpose.msra.mxu0 0
    %1313 = vmatpush.bf16.xpose.msra.mxu0 0
    %1314 = vmatpush.bf16.xpose.msra.mxu0 0
    %1315 = vmatpush.bf16.xpose.msra.mxu0 0
    %1316 = vmatpush.bf16.xpose.msra.mxu0 0
    %1317 = vmatpush.bf16.xpose.msra.mxu0 %v1308
    %1318 = vmatmul.bf16.gmra.mxu0 %v1305
    %v1319 = vpop.f32.mrf.mxu0
    %v1320 = vadd.f32 0.0, %v1319
    %v1321 = vpop.f32.mrf.mxu0
    %1322 = vdwg.mxu0
    %v1323 = vadd.f32 %v1158, %v133
    %v1324 = vadd.f32 %v1181, %v134
    %v1325 = vadd.f32 %v1204, %v135
    %v1326 = vadd.f32 %v1227, %v136
    %v1327 = vadd.f32 %v1251, %v137
    %v1328 = vadd.f32 %v1274, %v138
    %v1329 = vadd.f32 %v1297, %v139
    %v1330 = vadd.f32 %v1320, %v140
    %v1331 = vsel %vm424, %v1323, -inf
    %1332 = vmax.xlane.f32.xlu0 %v1331
    %v1333 = vpop.xlane.xlu0 %1332
    %v1334 = vsel %vm424, %v1324, -inf
    %1335 = vmax.xlane.f32.xlu0 %v1334
    %v1336 = vpop.xlane.xlu0 %1335
    %v1337 = vsel %vm424, %v1325, -inf
    %1338 = vmax.xlane.f32.xlu0 %v1337
    %v1339 = vpop.xlane.xlu0 %1338
    %v1340 = vsel %vm424, %v1326, -inf
    %1341 = vmax.xlane.f32.xlu0 %v1340
    %v1342 = vpop.xlane.xlu0 %1341
    %v1343 = vsel %vm424, %v1327, -inf
    %1344 = vmax.xlane.f32.xlu0 %v1343
    %v1345 = vpop.xlane.xlu0 %1344
    %v1346 = vsel %vm424, %v1328, -inf
    %1347 = vmax.xlane.f32.xlu0 %v1346
    %v1348 = vpop.xlane.xlu0 %1347
    %v1349 = vsel %vm424, %v1329, -inf
    %1350 = vmax.xlane.f32.xlu0 %v1349
    %v1351 = vpop.xlane.xlu0 %1350
    %v1352 = vsel %vm424, %v1330, -inf
    %1353 = vmax.xlane.f32.xlu0 %v1352
    %v1354 = vpop.xlane.xlu0 %1353
    %v1355 = vsub.f32 %v1323, %v1333
    %v1356 = vsub.f32 %v1324, %v1336
    %v1357 = vsub.f32 %v1325, %v1339
    %v1358 = vsub.f32 %v1326, %v1342
    %v1359 = vsub.f32 %v1327, %v1345
    %v1360 = vsub.f32 %v1328, %v1348
    %v1361 = vsub.f32 %v1329, %v1351
    %v1362 = vsub.f32 %v1330, %v1354
    %v1363 = vmul.f32 %v1355, 1.442695
    %v1364 = vpow.pop %v1363
    %v1365 = vmul.f32 %v1356, 1.442695
    %v1366 = vpow.pop %v1365
    %v1367 = vmul.f32 %v1357, 1.442695
    %v1368 = vpow.pop %v1367
    %v1369 = vmul.f32 %v1358, 1.442695
    %v1370 = vpow.pop %v1369
    %v1371 = vmul.f32 %v1359, 1.442695
    %v1372 = vpow.pop %v1371
    %v1373 = vmul.f32 %v1360, 1.442695
    %v1374 = vpow.pop %v1373
    %v1375 = vmul.f32 %v1361, 1.442695
    %v1376 = vpow.pop %v1375
    %v1377 = vmul.f32 %v1362, 1.442695
    %v1378 = vpow.pop %v1377
    %v1379 = vsel %vm424, %v1364, 0.0
    %1380 = vadd.xlane.f32.xlu0 %v1379
    %v1381 = vpop.xlane.xlu0 %1380
    %v1382 = vsel %vm424, %v1366, 0.0
    %1383 = vadd.xlane.f32.xlu0 %v1382
    %v1384 = vpop.xlane.xlu0 %1383
    %v1385 = vsel %vm424, %v1368, 0.0
    %1386 = vadd.xlane.f32.xlu0 %v1385
    %v1387 = vpop.xlane.xlu0 %1386
    %v1388 = vsel %vm424, %v1370, 0.0
    %1389 = vadd.xlane.f32.xlu0 %v1388
    %v1390 = vpop.xlane.xlu0 %1389
    %v1391 = vsel %vm424, %v1372, 0.0
    %1392 = vadd.xlane.f32.xlu0 %v1391
    %v1393 = vpop.xlane.xlu0 %1392
    %v1394 = vsel %vm424, %v1374, 0.0
    %1395 = vadd.xlane.f32.xlu0 %v1394
    %v1396 = vpop.xlane.xlu0 %1395
    %v1397 = vsel %vm424, %v1376, 0.0
    %1398 = vadd.xlane.f32.xlu0 %v1397
    %v1399 = vpop.xlane.xlu0 %1398
    %v1400 = vsel %vm424, %v1378, 0.0
    %1401 = vadd.xlane.f32.xlu0 %v1400
    %v1402 = vpop.xlane.xlu0 %1401
    %v1403 = vrcp.pop %v1381
    %v1404 = vrcp.pop %v1384
    %v1405 = vrcp.pop %v1387
    %v1406 = vrcp.pop %v1390
    %v1407 = vrcp.pop %v1393
    %v1408 = vrcp.pop %v1396
    %v1409 = vrcp.pop %v1399
    %v1410 = vrcp.pop %v1402
    %v1411 = vmul.f32 %v1364, %v1403
    %v1412 = vmul.f32 %v1366, %v1404
    %v1413 = vmul.f32 %v1368, %v1405
    %v1414 = vmul.f32 %v1370, %v1406
    %v1415 = vmul.f32 %v1372, %v1407
    %v1416 = vmul.f32 %v1374, %v1408
    %v1417 = vmul.f32 %v1376, %v1409
    %v1418 = vmul.f32 %v1378, %v1410
    %v1419 = vpack.c.bf16 %v1411, %v1411
    %v1420 = vpack.c.bf16 %v1412, %v1412
    %v1421 = vpack.c.bf16 %v1413, %v1413
    %v1422 = vpack.c.bf16 %v1414, %v1414
    %v1423 = vpack.c.bf16 %v1415, %v1415
    %v1424 = vpack.c.bf16 %v1416, %v1416
    %v1425 = vpack.c.bf16 %v1417, %v1417
    %v1426 = vpack.c.bf16 %v1418, %v1418
    %v1427 = vunpack.c.h.b16 %v1135
    %v1428 = vpack.c.b16 %v1427, %v1427
    %v1430 = vsel %vm424, %v1419, 0
    %v1433 = vsel %vm526, %v1428, 0
    %1435 = vmatpush.bf16.msra.mxu0 0
    %1436 = vmatpush.bf16.msra.mxu0 0
    %1437 = vmatpush.bf16.msra.mxu0 0
    %1438 = vmatpush.bf16.msra.mxu0 0
    %1439 = vmatpush.bf16.msra.mxu0 0
    %1440 = vmatpush.bf16.msra.mxu0 0
    %1441 = vmatpush.bf16.msra.mxu0 0
    %1442 = vmatpush.bf16.msra.mxu0 %v1433
    %1443 = vmatmul.bf16.gmra.mxu0 %v1430
    %v1444 = vpop.f32.mrf.mxu0
    %v1445 = vadd.f32 0.0, %v1444
    %v1446 = vpop.f32.mrf.mxu0
    %1447 = vdwg.mxu0
    %1448 = vrot.lane.b32.xlu0 %v1428, 112
    %v1449 = vpop.permute.xlu0 %1448
    %v1451 = vsel %vm424, %v1420, 0
    %v1454 = vsel %vm526, %v1449, 0
    %1456 = vmatpush.bf16.msra.mxu0 0
    %1457 = vmatpush.bf16.msra.mxu0 0
    %1458 = vmatpush.bf16.msra.mxu0 0
    %1459 = vmatpush.bf16.msra.mxu0 0
    %1460 = vmatpush.bf16.msra.mxu0 0
    %1461 = vmatpush.bf16.msra.mxu0 0
    %1462 = vmatpush.bf16.msra.mxu0 0
    %1463 = vmatpush.bf16.msra.mxu0 %v1454
    %1464 = vmatmul.bf16.gmra.mxu0 %v1451
    %v1465 = vpop.f32.mrf.mxu0
    %v1466 = vadd.f32 0.0, %v1465
    %v1467 = vpop.f32.mrf.mxu0
    %1468 = vdwg.mxu0
    %1469 = vrot.lane.b32.xlu0 %v1428, 96
    %v1470 = vpop.permute.xlu0 %1469
    %v1472 = vsel %vm424, %v1421, 0
    %v1475 = vsel %vm526, %v1470, 0
    %1477 = vmatpush.bf16.msra.mxu0 0
    %1478 = vmatpush.bf16.msra.mxu0 0
    %1479 = vmatpush.bf16.msra.mxu0 0
    %1480 = vmatpush.bf16.msra.mxu0 0
    %1481 = vmatpush.bf16.msra.mxu0 0
    %1482 = vmatpush.bf16.msra.mxu0 0
    %1483 = vmatpush.bf16.msra.mxu0 0
    %1484 = vmatpush.bf16.msra.mxu0 %v1475
    %1485 = vmatmul.bf16.gmra.mxu0 %v1472
    %v1486 = vpop.f32.mrf.mxu0
    %v1487 = vadd.f32 0.0, %v1486
    %v1488 = vpop.f32.mrf.mxu0
    %1489 = vdwg.mxu0
    %1490 = vrot.lane.b32.xlu0 %v1428, 80
    %v1491 = vpop.permute.xlu0 %1490
    %v1493 = vsel %vm424, %v1422, 0
    %v1496 = vsel %vm526, %v1491, 0
    %1498 = vmatpush.bf16.msra.mxu0 0
    %1499 = vmatpush.bf16.msra.mxu0 0
    %1500 = vmatpush.bf16.msra.mxu0 0
    %1501 = vmatpush.bf16.msra.mxu0 0
    %1502 = vmatpush.bf16.msra.mxu0 0
    %1503 = vmatpush.bf16.msra.mxu0 0
    %1504 = vmatpush.bf16.msra.mxu0 0
    %1505 = vmatpush.bf16.msra.mxu0 %v1496
    %1506 = vmatmul.bf16.gmra.mxu0 %v1493
    %v1507 = vpop.f32.mrf.mxu0
    %v1508 = vadd.f32 0.0, %v1507
    %v1509 = vpop.f32.mrf.mxu0
    %1510 = vdwg.mxu0
    %1512 = vrot.lane.b32.xlu0 %v1466, 16
    %v1513 = vpop.permute.xlu0 %1512
    %1516 = vrot.lane.b32.xlu0 %v1487, 32
    %v1517 = vpop.permute.xlu0 %1516
    %1520 = vrot.lane.b32.xlu0 %v1508, 48
    %v1521 = vpop.permute.xlu0 %1520
    %v1523 = vsel %vm234, %v1445, %v1513
    %v1524 = vsel %vm619, %v1523, %v1517
    %v1525 = vsel %vm621, %v1524, %v1521
    %v1526 = vunpack.c.h.b16 %v1136
    %v1527 = vpack.c.b16 %v1526, %v1526
    %v1529 = vsel %vm424, %v1423, 0
    %v1532 = vsel %vm526, %v1527, 0
    %1534 = vmatpush.bf16.msra.mxu0 0
    %1535 = vmatpush.bf16.msra.mxu0 0
    %1536 = vmatpush.bf16.msra.mxu0 0
    %1537 = vmatpush.bf16.msra.mxu0 0
    %1538 = vmatpush.bf16.msra.mxu0 0
    %1539 = vmatpush.bf16.msra.mxu0 0
    %1540 = vmatpush.bf16.msra.mxu0 0
    %1541 = vmatpush.bf16.msra.mxu0 %v1532
    %1542 = vmatmul.bf16.gmra.mxu0 %v1529
    %v1543 = vpop.f32.mrf.mxu0
    %v1544 = vadd.f32 0.0, %v1543
    %v1545 = vpop.f32.mrf.mxu0
    %1546 = vdwg.mxu0
    %1547 = vrot.lane.b32.xlu0 %v1527, 112
    %v1548 = vpop.permute.xlu0 %1547
    %v1550 = vsel %vm424, %v1424, 0
    %v1553 = vsel %vm526, %v1548, 0
    %1555 = vmatpush.bf16.msra.mxu0 0
    %1556 = vmatpush.bf16.msra.mxu0 0
    %1557 = vmatpush.bf16.msra.mxu0 0
    %1558 = vmatpush.bf16.msra.mxu0 0
    %1559 = vmatpush.bf16.msra.mxu0 0
    %1560 = vmatpush.bf16.msra.mxu0 0
    %1561 = vmatpush.bf16.msra.mxu0 0
    %1562 = vmatpush.bf16.msra.mxu0 %v1553
    %1563 = vmatmul.bf16.gmra.mxu0 %v1550
    %v1564 = vpop.f32.mrf.mxu0
    %v1565 = vadd.f32 0.0, %v1564
    %v1566 = vpop.f32.mrf.mxu0
    %1567 = vdwg.mxu0
    %1568 = vrot.lane.b32.xlu0 %v1527, 96
    %v1569 = vpop.permute.xlu0 %1568
    %v1571 = vsel %vm424, %v1425, 0
    %v1574 = vsel %vm526, %v1569, 0
    %1576 = vmatpush.bf16.msra.mxu0 0
    %1577 = vmatpush.bf16.msra.mxu0 0
    %1578 = vmatpush.bf16.msra.mxu0 0
    %1579 = vmatpush.bf16.msra.mxu0 0
    %1580 = vmatpush.bf16.msra.mxu0 0
    %1581 = vmatpush.bf16.msra.mxu0 0
    %1582 = vmatpush.bf16.msra.mxu0 0
    %1583 = vmatpush.bf16.msra.mxu0 %v1574
    %1584 = vmatmul.bf16.gmra.mxu0 %v1571
    %v1585 = vpop.f32.mrf.mxu0
    %v1586 = vadd.f32 0.0, %v1585
    %v1587 = vpop.f32.mrf.mxu0
    %1588 = vdwg.mxu0
    %1589 = vrot.lane.b32.xlu0 %v1527, 80
    %v1590 = vpop.permute.xlu0 %1589
    %v1592 = vsel %vm424, %v1426, 0
    %v1595 = vsel %vm526, %v1590, 0
    %1597 = vmatpush.bf16.msra.mxu0 0
    %1598 = vmatpush.bf16.msra.mxu0 0
    %1599 = vmatpush.bf16.msra.mxu0 0
    %1600 = vmatpush.bf16.msra.mxu0 0
    %1601 = vmatpush.bf16.msra.mxu0 0
    %1602 = vmatpush.bf16.msra.mxu0 0
    %1603 = vmatpush.bf16.msra.mxu0 0
    %1604 = vmatpush.bf16.msra.mxu0 %v1595
    %1605 = vmatmul.bf16.gmra.mxu0 %v1592
    %v1606 = vpop.f32.mrf.mxu0
    %v1607 = vadd.f32 0.0, %v1606
    %v1608 = vpop.f32.mrf.mxu0
    %1609 = vdwg.mxu0
    %1611 = vrot.lane.b32.xlu0 %v1565, 16
    %v1612 = vpop.permute.xlu0 %1611
    %1615 = vrot.lane.b32.xlu0 %v1586, 32
    %v1616 = vpop.permute.xlu0 %1615
    %1619 = vrot.lane.b32.xlu0 %v1607, 48
    %v1620 = vpop.permute.xlu0 %1619
    %v1622 = vsel %vm234, %v1544, %v1612
    %v1623 = vsel %vm619, %v1622, %v1616
    %v1624 = vsel %vm621, %v1623, %v1620
    %s1625 = scalar_lea.vmem %s6, 32
    %v1626 = vld [vmem:[%s1625] sm:$0xf]
    %v1627 = vld [vmem:[%s1625 + $0x4] sm:$0xf]
    %v1628 = vld [vmem:[%s1625 + $0x8] sm:$0xf]
    %v1629 = vld [vmem:[%s1625 + $0xc] sm:$0xf]
    %v1630 = vld [vmem:[%s1625 + $0x10] sm:$0xf]
    %v1631 = vld [vmem:[%s1625 + $0x14] sm:$0xf]
    %v1632 = vld [vmem:[%s1625 + $0x18] sm:$0xf]
    %v1633 = vld [vmem:[%s1625 + $0x1c] sm:$0xf]
    %s1634 = scalar_lea.vmem %s7, 1
    %v1635 = vld [vmem:[%s1634] sm:$0x1]
    %v1636 = vpack.c.bf16 %v1624, %v1525
    %v1638 = vperm.slane %v1635, 0
    %v1648 = vunpack.c.l.b16 %v1626
    %v1649 = vunpack.c.l.b16 %v1627
    %v1650 = vunpack.c.l.b16 %v1628
    %v1651 = vunpack.c.l.b16 %v1629
    %v1652 = vunpack.c.l.b16 %v1630
    %v1653 = vunpack.c.l.b16 %v1631
    %v1654 = vunpack.c.l.b16 %v1632
    %v1655 = vunpack.c.l.b16 %v1633
    %v1656 = vpack.c.b16 %v1649, %v1648
    %v1657 = vpack.c.b16 %v1651, %v1650
    %v1658 = vpack.c.b16 %v1653, %v1652
    %v1659 = vpack.c.b16 %v1655, %v1654
    %v1665 = vsel %vm71, %v1636, 0
    %1667 = vmatpush.bf16.msra.mxu0 0
    %1668 = vmatpush.bf16.msra.mxu0 0
    %1669 = vmatpush.bf16.msra.mxu0 0
    %1670 = vmatpush.bf16.msra.mxu0 0
    %1671 = vmatpush.bf16.msra.mxu0 %v1659
    %1672 = vmatpush.bf16.msra.mxu0 %v1658
    %1673 = vmatpush.bf16.msra.mxu0 %v1657
    %1674 = vmatpush.bf16.msra.mxu0 %v1656
    %1675 = vmatmul.bf16.gmra.mxu0 %v1665
    %v1676 = vpop.f32.mrf.mxu0
    %v1677 = vadd.f32 %v1638, %v1676
    %v1678 = vpop.f32.mrf.mxu0
    %v1679 = vadd.f32 %v1638, %v1678
    %1680 = vdwg.mxu0
    %v1681 = vadd.f32 %v1677, %v1045
    %v1682 = vadd.f32 %v1679, %v1046
    %s1683 = scalar_lea.vmem %s8, 1
    %v1684 = vld [vmem:[%s1683] sm:$0x1]
    %s1685 = scalar_lea.vmem %s9, 1
    %v1686 = vld [vmem:[%s1685] sm:$0x1]
    %v1687 = vsel %vm71, %v1681, 0.0
    %1688 = vadd.xlane.f32.xlu0 %v1687
    %v1689 = vpop.xlane.xlu0 %1688
    %v1690 = vsel %vm71, %v1682, 0.0
    %1691 = vadd.xlane.f32.xlu0 %v1690
    %v1692 = vpop.xlane.xlu0 %1691
    %v1693 = vmul.f32 %v1689, %v84
    %v1694 = vmul.f32 %v1692, %v84
    %v1695 = vsub.f32 %v1681, %v1693
    %v1696 = vsub.f32 %v1682, %v1694
    %v1697 = vmul.f32 %v1695, %v1695
    %v1698 = vmul.f32 %v1696, %v1696
    %v1699 = vsel %vm71, %v1697, 0.0
    %1700 = vadd.xlane.f32.xlu0 %v1699
    %v1701 = vpop.xlane.xlu0 %1700
    %v1702 = vsel %vm71, %v1698, 0.0
    %1703 = vadd.xlane.f32.xlu0 %v1702
    %v1704 = vpop.xlane.xlu0 %1703
    %v1705 = vmul.f32 %v1701, %v84
    %v1706 = vmul.f32 %v1704, %v84
    %v1707 = vadd.f32 %v1705, 1e-12
    %v1708 = vadd.f32 %v1706, 1e-12
    %v1709 = vrsqrt.pop %v1707
    %v1710 = vmul.f32 %v1709, %v1707
    %v1711 = vmul.f32 %v1710, %v1709
    %v1712 = vmul.f32 0.5, %v1711
    %v1713 = vsub.f32 1.5, %v1712
    %v1714 = vmul.f32 %v1709, %v1713
    %vm1715 = vweird.f32 %v1707
    %vm1716 = vweird.f32 %v1709
    %vm1717 = vmor %vm1715, %vm1716
    %v1718 = vsel %vm1717, %v1709, %v1714
    %v1719 = vrsqrt.pop %v1708
    %v1720 = vmul.f32 %v1719, %v1708
    %v1721 = vmul.f32 %v1720, %v1719
    %v1722 = vmul.f32 0.5, %v1721
    %v1723 = vsub.f32 1.5, %v1722
    %v1724 = vmul.f32 %v1719, %v1723
    %vm1725 = vweird.f32 %v1708
    %vm1726 = vweird.f32 %v1719
    %vm1727 = vmor %vm1725, %vm1726
    %v1728 = vsel %vm1727, %v1719, %v1724
    %v1729 = vmul.f32 %v1695, %v1718
    %v1730 = vmul.f32 %v1696, %v1728
    %v1732 = vperm.slane %v1684, 0
    %v1734 = vmul.f32 %v1729, %v1732
    %v1735 = vmul.f32 %v1730, %v1732
    %v1737 = vperm.slane %v1686, 0
    %v1739 = vadd.f32 %v1734, %v1737
    %v1740 = vadd.f32 %v1735, %v1737
    %s1741 = scalar_lea.vmem %s10, 32
    %v1742 = vld [vmem:[%s1741] sm:$0xf]
    %v1743 = vld [vmem:[%s1741 + $0x4] sm:$0xf]
    %v1744 = vld [vmem:[%s1741 + $0x8] sm:$0xf]
    %v1745 = vld [vmem:[%s1741 + $0xc] sm:$0xf]
    %v1746 = vld [vmem:[%s1741 + $0x10] sm:$0xf]
    %v1747 = vld [vmem:[%s1741 + $0x14] sm:$0xf]
    %v1748 = vld [vmem:[%s1741 + $0x18] sm:$0xf]
    %v1749 = vld [vmem:[%s1741 + $0x1c] sm:$0xf]
    %s1750 = scalar_lea.vmem %s11, 1
    %v1751 = vld [vmem:[%s1750] sm:$0x1]
    %v1752 = vpack.c.bf16 %v1740, %v1739
    %v1754 = vperm.slane %v1751, 0
    %v1764 = vunpack.c.l.b16 %v1742
    %v1765 = vunpack.c.l.b16 %v1743
    %v1766 = vunpack.c.l.b16 %v1744
    %v1767 = vunpack.c.l.b16 %v1745
    %v1768 = vunpack.c.l.b16 %v1746
    %v1769 = vunpack.c.l.b16 %v1747
    %v1770 = vunpack.c.l.b16 %v1748
    %v1771 = vunpack.c.l.b16 %v1749
    %v1772 = vpack.c.b16 %v1765, %v1764
    %v1773 = vpack.c.b16 %v1767, %v1766
    %v1774 = vpack.c.b16 %v1769, %v1768
    %v1775 = vpack.c.b16 %v1771, %v1770
    %v1781 = vsel %vm71, %v1752, 0
    %1783 = vmatpush.bf16.msra.mxu0 0
    %1784 = vmatpush.bf16.msra.mxu0 0
    %1785 = vmatpush.bf16.msra.mxu0 0
    %1786 = vmatpush.bf16.msra.mxu0 0
    %1787 = vmatpush.bf16.msra.mxu0 %v1775
    %1788 = vmatpush.bf16.msra.mxu0 %v1774
    %1789 = vmatpush.bf16.msra.mxu0 %v1773
    %1790 = vmatpush.bf16.msra.mxu0 %v1772
    %1791 = vmatmul.bf16.gmra.mxu0 %v1781
    %v1792 = vpop.f32.mrf.mxu0
    %v1793 = vadd.f32 %v1754, %v1792
    %v1794 = vpop.f32.mrf.mxu0
    %v1795 = vadd.f32 %v1754, %v1794
    %1796 = vdwg.mxu0
    %v1797 = vmul.f32 %v1793, 0.5
    %v1798 = vmul.f32 %v1795, 0.5
    %v1799 = vmul.f32 %v1793, %v1793
    %v1800 = vmul.f32 %v1795, %v1795
    %v1801 = vmul.f32 %v1799, %v1793
    %v1802 = vmul.f32 %v1800, %v1795
    %v1803 = vmul.f32 %v1801, 0.044715
    %v1804 = vmul.f32 %v1802, 0.044715
    %v1805 = vadd.f32 %v1793, %v1803
    %v1806 = vadd.f32 %v1795, %v1804
    %v1807 = vmul.f32 %v1805, 0.7978846
    %v1808 = vmul.f32 %v1806, 0.7978846
    %v1809 = vtanh.pop %v1807
    %v1810 = vtanh.pop %v1808
    %v1811 = vadd.f32 %v1809, 1.0
    %v1812 = vadd.f32 %v1810, 1.0
    %v1813 = vmul.f32 %v1797, %v1811
    %v1814 = vmul.f32 %v1798, %v1812
    %s1815 = scalar_lea.vmem %s12, 64
    %v1816 = vld [vmem:[%s1815] sm:$0xf]
    %v1817 = vld [vmem:[%s1815 + $0x4] sm:$0xf]
    %v1818 = vld [vmem:[%s1815 + $0x8] sm:$0xf]
    %v1819 = vld [vmem:[%s1815 + $0xc] sm:$0xf]
    %v1820 = vld [vmem:[%s1815 + $0x10] sm:$0xf]
    %v1821 = vld [vmem:[%s1815 + $0x14] sm:$0xf]
    %v1822 = vld [vmem:[%s1815 + $0x18] sm:$0xf]
    %v1823 = vld [vmem:[%s1815 + $0x1c] sm:$0xf]
    %v1824 = vld [vmem:[%s1815 + $0x20] sm:$0xf]
    %v1825 = vld [vmem:[%s1815 + $0x24] sm:$0xf]
    %v1826 = vld [vmem:[%s1815 + $0x28] sm:$0xf]
    %v1827 = vld [vmem:[%s1815 + $0x2c] sm:$0xf]
    %v1828 = vld [vmem:[%s1815 + $0x30] sm:$0xf]
    %v1829 = vld [vmem:[%s1815 + $0x34] sm:$0xf]
    %v1830 = vld [vmem:[%s1815 + $0x38] sm:$0xf]
    %v1831 = vld [vmem:[%s1815 + $0x3c] sm:$0xf]
    %s1832 = scalar_lea.vmem %s13, 1
    %v1833 = vld [vmem:[%s1832] sm:$0x1]
    %v1834 = vpack.c.bf16 %v1814, %v1813
    %v1836 = vperm.slane %v1833, 0
    %v1854 = vunpack.c.l.b16 %v1816
    %v1855 = vunpack.c.l.b16 %v1817
    %v1856 = vunpack.c.l.b16 %v1818
    %v1857 = vunpack.c.l.b16 %v1819
    %v1858 = vunpack.c.l.b16 %v1820
    %v1859 = vunpack.c.l.b16 %v1821
    %v1860 = vunpack.c.l.b16 %v1822
    %v1861 = vunpack.c.l.b16 %v1823
    %v1862 = vunpack.c.l.b16 %v1824
    %v1863 = vunpack.c.l.b16 %v1825
    %v1864 = vunpack.c.l.b16 %v1826
    %v1865 = vunpack.c.l.b16 %v1827
    %v1866 = vunpack.c.l.b16 %v1828
    %v1867 = vunpack.c.l.b16 %v1829
    %v1868 = vunpack.c.l.b16 %v1830
    %v1869 = vunpack.c.l.b16 %v1831
    %v1870 = vpack.c.b16 %v1855, %v1854
    %v1871 = vpack.c.b16 %v1857, %v1856
    %v1872 = vpack.c.b16 %v1859, %v1858
    %v1873 = vpack.c.b16 %v1861, %v1860
    %v1874 = vpack.c.b16 %v1863, %v1862
    %v1875 = vpack.c.b16 %v1865, %v1864
    %v1876 = vpack.c.b16 %v1867, %v1866
    %v1877 = vpack.c.b16 %v1869, %v1868
    %1886 = vmatpush.bf16.msra.mxu0 %v1877
    %1887 = vmatpush.bf16.msra.mxu0 %v1876
    %1888 = vmatpush.bf16.msra.mxu0 %v1875
    %1889 = vmatpush.bf16.msra.mxu0 %v1874
    %1890 = vmatpush.bf16.msra.mxu0 %v1873
    %1891 = vmatpush.bf16.msra.mxu0 %v1872
    %1892 = vmatpush.bf16.msra.mxu0 %v1871
    %1893 = vmatpush.bf16.msra.mxu0 %v1870
    %1894 = vmatmul.bf16.gmra.mxu0 %v1834
    %v1895 = vpop.f32.mrf.mxu0
    %v1896 = vadd.f32 %v1836, %v1895
    %v1897 = vpop.f32.mrf.mxu0
    %v1898 = vadd.f32 %v1836, %v1897
    %1899 = vdwg.mxu0
    %v1900 = vadd.f32 %v1896, %v1739
    %v1901 = vadd.f32 %v1898, %v1740
    %s1902 = scalar_lea.vmem %s14, 1
    %v1903 = vld [vmem:[%s1902] sm:$0x1]
    %s1904 = scalar_lea.vmem %s15, 1
    %v1905 = vld [vmem:[%s1904] sm:$0x1]
    %v1906 = vsel %vm71, %v1900, 0.0
    %1907 = vadd.xlane.f32.xlu0 %v1906
    %v1908 = vpop.xlane.xlu0 %1907
    %v1909 = vsel %vm71, %v1901, 0.0
    %1910 = vadd.xlane.f32.xlu0 %v1909
    %v1911 = vpop.xlane.xlu0 %1910
    %v1912 = vmul.f32 %v1908, %v84
    %v1913 = vmul.f32 %v1911, %v84
    %v1914 = vsub.f32 %v1900, %v1912
    %v1915 = vsub.f32 %v1901, %v1913
    %v1916 = vmul.f32 %v1914, %v1914
    %v1917 = vmul.f32 %v1915, %v1915
    %v1918 = vsel %vm71, %v1916, 0.0
    %1919 = vadd.xlane.f32.xlu0 %v1918
    %v1920 = vpop.xlane.xlu0 %1919
    %v1921 = vsel %vm71, %v1917, 0.0
    %1922 = vadd.xlane.f32.xlu0 %v1921
    %v1923 = vpop.xlane.xlu0 %1922
    %v1924 = vmul.f32 %v1920, %v84
    %v1925 = vmul.f32 %v1923, %v84
    %v1926 = vadd.f32 %v1924, 1e-12
    %v1927 = vadd.f32 %v1925, 1e-12
    %v1928 = vrsqrt.pop %v1926
    %v1929 = vmul.f32 %v1928, %v1926
    %v1930 = vmul.f32 %v1929, %v1928
    %v1931 = vmul.f32 0.5, %v1930
    %v1932 = vsub.f32 1.5, %v1931
    %v1933 = vmul.f32 %v1928, %v1932
    %vm1934 = vweird.f32 %v1926
    %vm1935 = vweird.f32 %v1928
    %vm1936 = vmor %vm1934, %vm1935
    %v1937 = vsel %vm1936, %v1928, %v1933
    %v1938 = vrsqrt.pop %v1927
    %v1939 = vmul.f32 %v1938, %v1927
    %v1940 = vmul.f32 %v1939, %v1938
    %v1941 = vmul.f32 0.5, %v1940
    %v1942 = vsub.f32 1.5, %v1941
    %v1943 = vmul.f32 %v1938, %v1942
    %vm1944 = vweird.f32 %v1927
    %vm1945 = vweird.f32 %v1938
    %vm1946 = vmor %vm1944, %vm1945
    %v1947 = vsel %vm1946, %v1938, %v1943
    %v1948 = vmul.f32 %v1914, %v1937
    %v1949 = vmul.f32 %v1915, %v1947
    %v1951 = vperm.slane %v1903, 0
    %v1953 = vmul.f32 %v1948, %v1951
    %v1954 = vmul.f32 %v1949, %v1951
    %v1956 = vperm.slane %v1905, 0
    %v1958 = vadd.f32 %v1953, %v1956
    %v1959 = vadd.f32 %v1954, %v1956
    %v1961 = vrot.slane %v1959, 7
    %vm1963 = vcmask 1040384
    %v1964 = vsel %vm1963, %v1958, %v1961
    %v1965 = vld [vmem:[%s16] sm:$0xf]
    %v1966 = vld [vmem:[%s16 + $0x4] sm:$0xf]
    %v1967 = vld [vmem:[%s16 + $0x8] sm:$0xf]
    %v1968 = vld [vmem:[%s16 + $0xc] sm:$0xf]
    %v1969 = vld [vmem:[%s16 + $0x10] sm:$0xf]
    %v1970 = vld [vmem:[%s16 + $0x14] sm:$0xf]
    %v1971 = vld [vmem:[%s16 + $0x18] sm:$0xf]
    %v1972 = vld [vmem:[%s16 + $0x1c] sm:$0xf]
    %v1973 = vld [vmem:[%s17] sm:$0x1]
    %v1974 = vpack.c.bf16 %v1964, %v1964
    %v1976 = vperm.slane %v1973, 0
    %v1986 = vunpack.c.l.b16 %v1965
    %v1987 = vunpack.c.l.b16 %v1966
    %v1988 = vunpack.c.l.b16 %v1967
    %v1989 = vunpack.c.l.b16 %v1968
    %v1990 = vunpack.c.l.b16 %v1969
    %v1991 = vunpack.c.l.b16 %v1970
    %v1992 = vunpack.c.l.b16 %v1971
    %v1993 = vunpack.c.l.b16 %v1972
    %v1994 = vpack.c.b16 %v1987, %v1986
    %v1995 = vpack.c.b16 %v1989, %v1988
    %v1996 = vpack.c.b16 %v1991, %v1990
    %v1997 = vpack.c.b16 %v1993, %v1992
    %v2003 = vsel %vm71, %v1974, 0
    %2005 = vmatpush.bf16.msra.mxu0 0
    %2006 = vmatpush.bf16.msra.mxu0 0
    %2007 = vmatpush.bf16.msra.mxu0 0
    %2008 = vmatpush.bf16.msra.mxu0 0
    %2009 = vmatpush.bf16.msra.mxu0 %v1997
    %2010 = vmatpush.bf16.msra.mxu0 %v1996
    %2011 = vmatpush.bf16.msra.mxu0 %v1995
    %2012 = vmatpush.bf16.msra.mxu0 %v1994
    %2013 = vmatmul.bf16.gmra.mxu0 %v2003
    %v2014 = vpop.f32.mrf.mxu0
    %v2015 = vadd.f32 %v1976, %v2014
    %v2016 = vpop.f32.mrf.mxu0
    %2017 = vdwg.mxu0
    %v2018 = vtanh.pop %v2015
    %v2019 = vld [vmem:[%s18] sm:$0xf]
    %v2020 = vld [vmem:[%s18 + $0x4] sm:$0xf]
    %v2021 = vld [vmem:[%s18 + $0x8] sm:$0xf]
    %v2022 = vld [vmem:[%s18 + $0xc] sm:$0xf]
    %v2023 = vld [vmem:[%s18 + $0x10] sm:$0xf]
    %v2024 = vld [vmem:[%s18 + $0x14] sm:$0xf]
    %v2025 = vld [vmem:[%s18 + $0x18] sm:$0xf]
    %v2026 = vld [vmem:[%s18 + $0x1c] sm:$0xf]
    %v2027 = vld [vmem:[%s19] sm:$0x1]
    %v2028 = vpack.c.bf16 %v2018, %v2018
    %v2030 = vperm.slane %v2027, 0
    %v2040 = vunpack.c.l.b16 %v2019
    %v2041 = vunpack.c.l.b16 %v2020
    %v2042 = vunpack.c.l.b16 %v2021
    %v2043 = vunpack.c.l.b16 %v2022
    %v2044 = vunpack.c.l.b16 %v2023
    %v2045 = vunpack.c.l.b16 %v2024
    %v2046 = vunpack.c.l.b16 %v2025
    %v2047 = vunpack.c.l.b16 %v2026
    %v2048 = vpack.c.b16 %v2041, %v2040
    %v2049 = vpack.c.b16 %v2043, %v2042
    %v2050 = vpack.c.b16 %v2045, %v2044
    %v2051 = vpack.c.b16 %v2047, %v2046
    %v2057 = vsel %vm71, %v2028, 0
    %2059 = vmatpush.bf16.msra.mxu0 0
    %2060 = vmatpush.bf16.msra.mxu0 0
    %2061 = vmatpush.bf16.msra.mxu0 0
    %2062 = vmatpush.bf16.msra.mxu0 0
    %2063 = vmatpush.bf16.msra.mxu0 %v2051
    %2064 = vmatpush.bf16.msra.mxu0 %v2050
    %2065 = vmatpush.bf16.msra.mxu0 %v2049
    %2066 = vmatpush.bf16.msra.mxu0 %v2048
    %2067 = vmatmul.bf16.gmra.mxu0 %v2057
    %v2068 = vpop.f32.mrf.mxu0
    %v2069 = vadd.f32 %v2030, %v2068
    %v2070 = vpop.f32.mrf.mxu0
    %2071 = vdwg.mxu0
    %2072 = vst [vmem:[#allocation2] sm:$0x3] %v2069
    // Predicated region
    $region82: #{bert_classifier_forward.1} parent=1 // pred_check
      _
    $region83: #{bert_classifier_forward.1} parent=1 // pred_check_branch
      %2074 = sbr.rel (0) target = $region85
    $region84: #{bert_classifier_forward.1} parent=1 // pred_region
      %2076 = vsyncadd [#allocation3], 0
      %s2078 = sshll.u32 [#allocation2], 4
      %s2079 = int_to_ptr.vmem [resolvable:$true] %s2078
      %s2080 = sshll.u32 %s20, 4
      %s2081 = int_to_ptr.hbm [resolvable:$true] %s2080
      %2083 = dma.vmem_to_hbm [thread:$0]  %s2079, 32, %s2081, [#allocation3]
    $region85: #{bert_classifier_forward.1} parent=1 // pred_fallthru
      _
    // Predicated region
    $region86: #{bert_classifier_forward.1} parent=1 // pred_check
      _
    $region87: #{bert_classifier_forward.1} parent=1 // pred_check_branch
      %2085 = sbr.rel (0) target = $region89
    $region88: #{bert_classifier_forward.1} parent=1 // pred_region
      %2087 = dma.done [#allocation3], 32
    $region89: #{bert_classifier_forward.1} parent=1 // pred_fallthru
      _
    %2088 = vsyncpa [#allocation3], 1

</llo_original>
